<compile_context>
chip_gen: v6e
topology: v6e:2x2x1
jax: 0.10.0
libtpu: 0.0.40
codegen_flags: <defaults>
</compile_context>

<pallas_src>
import math
import functools

import jax
import jax.numpy as jnp
from jax import lax
from jax.experimental import pallas as pl
from jax.experimental.pallas import tpu as pltpu


# ---------------------------------------------------------------------------
# Fused Pallas kernel: all 4 streams, `batch_block` batch elements per step.
# ---------------------------------------------------------------------------
def _ssca_kernel(q1_ref, q2_ref, q3_ref, q4_ref, k_ref, v_ref,
                 w1_ref, w2_ref, w3_ref, w4_ref,
                 o1_ref, o2_ref, o3_ref, o4_ref,
                 *, kv_size, batch_block):
    alpha = 1.0 / math.sqrt(kv_size)           # folded attention scale
    q_refs = (q1_ref, q2_ref, q3_ref, q4_ref)
    w_refs = (w1_ref, w2_ref, w3_ref, w4_ref)
    o_refs = (o1_ref, o2_ref, o3_ref, o4_ref)

    for bi in range(batch_block):               # static unroll (1 or 2)
        # Shared k / v for this batch element; k L2-normalized exactly once.
        k = k_ref[bi].astype(jnp.float32)       # [KV, N]
        kn = k * lax.rsqrt(jnp.maximum(
            jnp.sum(k * k, axis=-1, keepdims=True), 1e-24))
        kn_b = kn.astype(jnp.bfloat16)
        v_b = v_ref[bi].astype(jnp.bfloat16)    # [KV, N]

        for q_ref, w_ref, o_ref in zip(q_refs, w_refs, o_refs):
            q = q_ref[bi].astype(jnp.float32)   # [c_i, N]
            # torch.nn.functional.normalize(dim=-1): x / max(||x||, 1e-12)
            qn = q * lax.rsqrt(jnp.maximum(
                jnp.sum(q * q, axis=-1, keepdims=True), 1e-24))

            # Unscaled attention logits: qn @ kn^T (contract N axes directly).
            attn_u = lax.dot_general(
                qn.astype(jnp.bfloat16), kn_b,
                dimension_numbers=(((1,), (1,)), ((), ())),
                preferred_element_type=jnp.float32)      # [c_i, KV]
            c_i, kv = attn_u.shape

            # InstanceNorm2d(1) over the whole [c_i, KV] slab (biased var,
            # eps=1e-5, no affine).  The 1/sqrt(KV) scale is folded into the
            # stats:  (alpha*x - mu) * istd == x * (alpha*istd) - mu*istd.
            inv_cnt = 1.0 / float(c_i * kv)
            mu_u = jnp.sum(attn_u) * inv_cnt             # E[x_u]
            ex2_u = jnp.sum(attn_u * attn_u) * inv_cnt    # E[x_u^2]
            mu = alpha * mu_u
            var = alpha * alpha * ex2_u - mu * mu
            istd = lax.rsqrt(var + 1e-5)
            attn = attn_u * (alpha * istd) - mu * istd

            # Softmax over KV (per row); approx reciprocal rides the EUP.
            attn = attn - jnp.max(attn, axis=-1, keepdims=True)
            e = jnp.exp(attn)
            probs = e * pl.reciprocal(
                jnp.sum(e, axis=-1, keepdims=True), approx=True)

            # Reassociated output projection: (W @ probs) @ v.
            wp = jnp.dot(w_ref[...].astype(jnp.bfloat16),
                         probs.astype(jnp.bfloat16),
                         preferred_element_type=jnp.float32)   # [c_i, KV]
            o = jnp.dot(wp.astype(jnp.bfloat16), v_b,
                        preferred_element_type=jnp.float32)    # [c_i, N]
            o_ref[bi] = o.astype(o_ref.dtype)


def _tensorcores_per_device():
    """Heuristic TC count: v7x has 2 TensorCores per chip, v5e/v6e have 1."""
    try:
        kind = jax.devices()[0].device_kind.lower()
    except Exception:
        return 1
    return 2 if "v7" in kind else 1


def ssca_fused_attention(qs, k, v, ws, kv_size):
    """qs: list of [B, c_i, N]; k/v: [B, KV, N]; ws: list of [c_i, c_i]."""
    b, kv, n = k.shape

    # Single grid step on single-TC chips (avoid per-step fixed overhead);
    # grid=(B,) parallel on v7x so both TensorCores take a batch element.
    gb = _tensorcores_per_device()
    if b % gb != 0:
        gb = 1
    bb = b // gb

    kernel = functools.partial(
        _ssca_kernel, kv_size=float(kv_size), batch_block=bb)

    in_specs = []
    for q in qs:
        c = q.shape[1]
        in_specs.append(pl.BlockSpec((bb, c, n), lambda i: (i, 0, 0)))
    in_specs.append(pl.BlockSpec((bb, kv, n), lambda i: (i, 0, 0)))   # k
    in_specs.append(pl.BlockSpec((bb, kv, n), lambda i: (i, 0, 0)))   # v
    for w in ws:
        c = w.shape[0]
        in_specs.append(pl.BlockSpec((c, c), lambda i: (0, 0)))

    out_specs = [pl.BlockSpec((bb, q.shape[1], n), lambda i: (i, 0, 0))
                 for q in qs]
    out_shape = tuple(jax.ShapeDtypeStruct((b, q.shape[1], n), jnp.float32)
                      for q in qs)

    outs = pl.pallas_call(
        kernel,
        out_shape=out_shape,
        grid_spec=pltpu.PrefetchScalarGridSpec(
            num_scalar_prefetch=0,
            grid=(gb,),
            in_specs=in_specs,
            out_specs=out_specs,
        ),
        compiler_params=pltpu.CompilerParams(
            dimension_semantics=("parallel",),
        ),
    )(*qs, k, v, *ws)
    return outs


# ---------------------------------------------------------------------------
# Plain-JAX conv glue (NCHW, matching PyTorch nn.Conv2d, bias=False)
# ---------------------------------------------------------------------------
def conv1x1(x, w):
    return jax.lax.conv_general_dilated(
        x, w, (1, 1), [(0, 0), (0, 0)],
        dimension_numbers=("NCHW", "OIHW", "NCHW"),
    )


def conv3x3_grouped(x, w, groups):
    return jax.lax.conv_general_dilated(
        x, w, (1, 1), [(1, 1), (1, 1)],
        dimension_numbers=("NCHW", "OIHW", "NCHW"),
        feature_group_count=groups,
    )


# ---------------------------------------------------------------------------
# Deterministic parameter init (shapes from SSCA.__init__, num_heads = 1)
# ---------------------------------------------------------------------------
def init_params(key, channel_num, kv_size):
    keys = jax.random.split(key, 16)
    idx = 0

    def nxt():
        nonlocal idx
        k_ = keys[idx]
        idx += 1
        return k_

    params = {}
    for i, c in enumerate(channel_num):
        params[f"mhead{i + 1}"] = 0.1 * jax.random.normal(nxt(), (c, c, 1, 1), jnp.float32)
        params[f"q{i + 1}"] = 0.1 * jax.random.normal(nxt(), (c, 2, 3, 3), jnp.float32)
        params[f"proj{i + 1}"] = 0.1 * jax.random.normal(nxt(), (c, c, 1, 1), jnp.float32)
    params["mheadk"] = 0.1 * jax.random.normal(nxt(), (kv_size, kv_size, 1, 1), jnp.float32)
    params["mheadv"] = 0.1 * jax.random.normal(nxt(), (kv_size, kv_size, 1, 1), jnp.float32)
    params["k"] = 0.1 * jax.random.normal(nxt(), (kv_size, 1, 3, 3), jnp.float32)
    params["v"] = 0.1 * jax.random.normal(nxt(), (kv_size, 1, 3, 3), jnp.float32)
    return params


# ---------------------------------------------------------------------------
# Full SSCA forward (jit-wrapped: convs + one pallas_call, one executable).
# ---------------------------------------------------------------------------
def ssca_forward(params, emb1, emb2, emb3, emb4, emb_all):
    b, _, h, w = emb1.shape
    n = h * w
    kv_size = emb_all.shape[1]

    # Shared k / v path: 1x1 conv then depthwise 3x3 conv (order per module).
    k = conv3x3_grouped(conv1x1(emb_all, params["mheadk"]), params["k"], kv_size)
    v = conv3x3_grouped(conv1x1(emb_all, params["mheadv"]), params["v"], kv_size)
    k = k.reshape(b, kv_size, n)
    v = v.reshape(b, kv_size, n)

    embs = [emb1, emb2, emb3, emb4]
    qs = []
    ws = []
    for i, emb in enumerate(embs):
        c = emb.shape[1]
        q = conv3x3_grouped(
            conv1x1(emb, params[f"mhead{i + 1}"]), params[f"q{i + 1}"], c // 2)
        qs.append(q.reshape(b, c, n))
        ws.append(params[f"proj{i + 1}"][:, :, 0, 0])

    # Fused Pallas hot path: normalize, QK^T, InstanceNorm, softmax,
    # reassociated (W @ P) @ V projection.  Four per-stream outputs.
    o1, o2, o3, o4 = ssca_fused_attention(qs, k, v, ws, kv_size)

    O1 = o1.reshape(b, embs[0].shape[1], h, w)
    O2 = o2.reshape(b, embs[1].shape[1], h, w)
    O3 = o3.reshape(b, embs[2].shape[1], h, w)
    O4 = o4.reshape(b, embs[3].shape[1], h, w)

    # weights (vis) is always None in the reference forward.
    return O1, O2, O3, O4, None


ssca_forward_jit = jax.jit(ssca_forward)


# ---------------------------------------------------------------------------
# Pure-JAX reference (mirrors the PyTorch forward in fp32) for a sanity check.
# ---------------------------------------------------------------------------
def ssca_reference(params, emb1, emb2, emb3, emb4, emb_all):
    b, _, h, w = emb1.shape
    n = h * w
    kv_size = emb_all.shape[1]
    k = conv3x3_grouped(conv1x1(emb_all, params["mheadk"]), params["k"], kv_size).reshape(b, kv_size, n)
    v = conv3x3_grouped(conv1x1(emb_all, params["mheadv"]), params["v"], kv_size).reshape(b, kv_size, n)
    kn = k / jnp.maximum(jnp.linalg.norm(k, axis=-1, keepdims=True), 1e-12)
    outs = []
    for i, emb in enumerate([emb1, emb2, emb3, emb4]):
        c = emb.shape[1]
        q = conv3x3_grouped(
            conv1x1(emb, params[f"mhead{i + 1}"]), params[f"q{i + 1}"], c // 2).reshape(b, c, n)
        qn = q / jnp.maximum(jnp.linalg.norm(q, axis=-1, keepdims=True), 1e-12)
        attn = jnp.einsum("bcn,bkn->bck", qn, kn) / math.sqrt(kv_size)
        mu = jnp.mean(attn, axis=(1, 2), keepdims=True)
        var = jnp.mean((attn - mu) ** 2, axis=(1, 2), keepdims=True)
        attn = (attn - mu) / jnp.sqrt(var + 1e-5)
        probs = jax.nn.softmax(attn, axis=-1)
        out = jnp.einsum("bck,bkn->bcn", probs, v)
        wmat = params[f"proj{i + 1}"][:, :, 0, 0]
        outs.append(jnp.einsum("oc,bcn->bon", wmat, out).reshape(b, c, h, w))
    return outs


if __name__ == "__main__":
    key = jax.random.PRNGKey(0)
    channel_num = (4, 8, 8, 12)
    kv_size = sum(channel_num)   # KV_size = 32
    b, h, w = 2, 8, 8

    k_emb, k_par = jax.random.split(key)
    ek = jax.random.split(k_emb, 5)
    emb1 = jax.random.normal(ek[0], (b, channel_num[0], h, w), jnp.float32)
    emb2 = jax.random.normal(ek[1], (b, channel_num[1], h, w), jnp.float32)
    emb3 = jax.random.normal(ek[2], (b, channel_num[2], h, w), jnp.float32)
    emb4 = jax.random.normal(ek[3], (b, channel_num[3], h, w), jnp.float32)
    emb_all = jax.random.normal(ek[4], (b, kv_size, h, w), jnp.float32)

    params = init_params(k_par, channel_num, kv_size)

    O1, O2, O3, O4, weights = ssca_forward_jit(params, emb1, emb2, emb3, emb4, emb_all)
    jax.block_until_ready((O1, O2, O3, O4))

    assert O1.shape == (b, channel_num[0], h, w)
    assert O2.shape == (b, channel_num[1], h, w)
    assert O3.shape == (b, channel_num[2], h, w)
    assert O4.shape == (b, channel_num[3], h, w)

    # Numerical sanity check vs. fp32 reference (bf16 MXU operands + approx
    # reciprocal give ~1e-3 relative deltas; use a generous tolerance).
    R1, R2, R3, R4 = ssca_reference(params, emb1, emb2, emb3, emb4, emb_all)
    for o_val, r_val in zip((O1, O2, O3, O4), (R1, R2, R3, R4)):
        assert jnp.allclose(o_val, r_val, atol=5e-2, rtol=5e-2), (
            float(jnp.max(jnp.abs(o_val - r_val))))

    print("KERNEL_OK")
</pallas_src>

<mosaic_0001>
module attributes {stable_mosaic.version = 11 : i64} {
  func.func @_ssca_kernel(%arg0: i32, %arg1: memref<2x4x64xf32, #tpu.memory_space<vmem>>, %arg2: memref<2x8x64xf32, #tpu.memory_space<vmem>>, %arg3: memref<2x8x64xf32, #tpu.memory_space<vmem>>, %arg4: memref<2x12x64xf32, #tpu.memory_space<vmem>>, %arg5: memref<2x32x64xf32, #tpu.memory_space<vmem>>, %arg6: memref<2x32x64xf32, #tpu.memory_space<vmem>>, %arg7: memref<4x4xf32, #tpu.memory_space<vmem>>, %arg8: memref<8x8xf32, #tpu.memory_space<vmem>>, %arg9: memref<8x8xf32, #tpu.memory_space<vmem>>, %arg10: memref<12x12xf32, #tpu.memory_space<vmem>>, %arg11: memref<2x4x64xf32, #tpu.memory_space<vmem>>, %arg12: memref<2x8x64xf32, #tpu.memory_space<vmem>>, %arg13: memref<2x8x64xf32, #tpu.memory_space<vmem>>, %arg14: memref<2x12x64xf32, #tpu.memory_space<vmem>>) attributes {dimension_semantics = [#tpu.dimension_semantics<parallel>], iteration_bounds = array<i64: 1>, scalar_prefetch = 0 : i64, scratch_operands = 0 : i64, tpu.core_type = #tpu.core_type<tc>, window_params = [{transform_indices = @transform_0, window_bounds = array<i64: 2, 4, 64>}, {transform_indices = @transform_1, window_bounds = array<i64: 2, 8, 64>}, {transform_indices = @transform_2, window_bounds = array<i64: 2, 8, 64>}, {transform_indices = @transform_3, window_bounds = array<i64: 2, 12, 64>}, {transform_indices = @transform_4, window_bounds = array<i64: 2, 32, 64>}, {transform_indices = @transform_5, window_bounds = array<i64: 2, 32, 64>}, {pipeline_mode = #tpu.pipeline_mode<synchronous>, transform_indices = @transform_6, window_bounds = array<i64: 4, 4>}, {pipeline_mode = #tpu.pipeline_mode<synchronous>, transform_indices = @transform_7, window_bounds = array<i64: 8, 8>}, {pipeline_mode = #tpu.pipeline_mode<synchronous>, transform_indices = @transform_8, window_bounds = array<i64: 8, 8>}, {pipeline_mode = #tpu.pipeline_mode<synchronous>, transform_indices = @transform_9, window_bounds = array<i64: 12, 12>}, {transform_indices = @transform_10, window_bounds = array<i64: 2, 4, 64>}, {transform_indices = @transform_11, window_bounds = array<i64: 2, 8, 64>}, {transform_indices = @transform_12, window_bounds = array<i64: 2, 8, 64>}, {transform_indices = @transform_13, window_bounds = array<i64: 2, 12, 64>}]} {
    %c0 = arith.constant 0 : index
    %c0_0 = arith.constant 0 : index
    %c0_1 = arith.constant 0 : index
    %0 = vector.load %arg5[%c0, %c0_0, %c0_1] : memref<2x32x64xf32, #tpu.memory_space<vmem>>, vector<1x32x64xf32>
    %1 = vector.shape_cast %0 : vector<1x32x64xf32> to vector<32x64xf32>
    %2 = arith.mulf %1, %1 : vector<32x64xf32>
    %cst = arith.constant dense<0.000000e+00> : vector<32xf32>
    %3 = vector.multi_reduction <add>, %2, %cst [1] : vector<32x64xf32> to vector<32xf32>
    %4 = vector.shape_cast %3 : vector<32xf32> to vector<32x1xf32>
    %cst_2 = arith.constant 1.000000e-24 : f32
    %5 = vector.broadcast %cst_2 : f32 to vector<32x1xf32>
    %6 = arith.maximumf %4, %5 : vector<32x1xf32>
    %7 = math.rsqrt %6 : vector<32x1xf32>
    %8 = vector.broadcast %7 : vector<32x1xf32> to vector<32x64xf32>
    %9 = arith.mulf %1, %8 : vector<32x64xf32>
    %10 = arith.truncf %9 : vector<32x64xf32> to vector<32x64xbf16>
    %c0_3 = arith.constant 0 : index
    %c0_4 = arith.constant 0 : index
    %c0_5 = arith.constant 0 : index
    %11 = vector.load %arg6[%c0_3, %c0_4, %c0_5] : memref<2x32x64xf32, #tpu.memory_space<vmem>>, vector<1x32x64xf32>
    %12 = vector.shape_cast %11 : vector<1x32x64xf32> to vector<32x64xf32>
    %13 = arith.truncf %12 : vector<32x64xf32> to vector<32x64xbf16>
    %c0_6 = arith.constant 0 : index
    %c0_7 = arith.constant 0 : index
    %c0_8 = arith.constant 0 : index
    %14 = vector.load %arg1[%c0_6, %c0_7, %c0_8] : memref<2x4x64xf32, #tpu.memory_space<vmem>>, vector<1x4x64xf32>
    %15 = vector.shape_cast %14 : vector<1x4x64xf32> to vector<4x64xf32>
    %16 = arith.mulf %15, %15 : vector<4x64xf32>
    %cst_9 = arith.constant dense<0.000000e+00> : vector<4xf32>
    %17 = vector.multi_reduction <add>, %16, %cst_9 [1] : vector<4x64xf32> to vector<4xf32>
    %18 = vector.shape_cast %17 : vector<4xf32> to vector<4x1xf32>
    %cst_10 = arith.constant 1.000000e-24 : f32
    %19 = vector.broadcast %cst_10 : f32 to vector<4x1xf32>
    %20 = arith.maximumf %18, %19 : vector<4x1xf32>
    %21 = math.rsqrt %20 : vector<4x1xf32>
    %22 = vector.broadcast %21 : vector<4x1xf32> to vector<4x64xf32>
    %23 = arith.mulf %15, %22 : vector<4x64xf32>
    %24 = arith.truncf %23 : vector<4x64xf32> to vector<4x64xbf16>
    %cst_11 = arith.constant dense<0.000000e+00> : vector<4x32xf32>
    %25 = tpu.matmul %24, %10, %cst_11 {dimension_numbers = #tpu.dot_dimension_numbers<[1], [1], [0], [0], [0, 0, 1, 0], [], []>} : vector<4x64xbf16>, vector<32x64xbf16>, vector<4x32xf32> -> vector<4x32xf32>
    %26 = vector.shape_cast %25 : vector<4x32xf32> to vector<1x4x32xf32>
    %cst_12 = arith.constant dense<0.000000e+00> : vector<1xf32>
    %27 = vector.multi_reduction <add>, %26, %cst_12 [1, 2] : vector<1x4x32xf32> to vector<1xf32>
    %28 = vector.shape_cast %27 : vector<1xf32> to vector<1x1x1xf32>
    %29 = vector.extract %28[0, 0, 0] : f32 from vector<1x1x1xf32>
    %cst_13 = arith.constant 7.812500e-03 : f32
    %30 = arith.mulf %29, %cst_13 : f32
    %31 = arith.mulf %25, %25 : vector<4x32xf32>
    %32 = vector.shape_cast %31 : vector<4x32xf32> to vector<1x4x32xf32>
    %cst_14 = arith.constant dense<0.000000e+00> : vector<1xf32>
    %33 = vector.multi_reduction <add>, %32, %cst_14 [1, 2] : vector<1x4x32xf32> to vector<1xf32>
    %34 = vector.shape_cast %33 : vector<1xf32> to vector<1x1x1xf32>
    %35 = vector.extract %34[0, 0, 0] : f32 from vector<1x1x1xf32>
    %cst_15 = arith.constant 7.812500e-03 : f32
    %36 = arith.mulf %35, %cst_15 : f32
    %cst_16 = arith.constant 0.176776692 : f32
    %37 = arith.mulf %cst_16, %30 : f32
    %cst_17 = arith.constant 3.125000e-02 : f32
    %38 = arith.mulf %cst_17, %36 : f32
    %39 = arith.mulf %37, %37 : f32
    %40 = arith.subf %38, %39 : f32
    %cst_18 = arith.constant 9.99999974E-6 : f32
    %41 = arith.addf %40, %cst_18 : f32
    %42 = math.rsqrt %41 : f32
    %cst_19 = arith.constant 0.176776692 : f32
    %43 = arith.mulf %cst_19, %42 : f32
    %44 = vector.broadcast %43 : f32 to vector<4x32xf32>
    %45 = arith.mulf %25, %44 : vector<4x32xf32>
    %46 = arith.mulf %37, %42 : f32
    %47 = vector.broadcast %46 : f32 to vector<4x32xf32>
    %48 = arith.subf %45, %47 : vector<4x32xf32>
    %cst_20 = arith.constant dense<0xFF800000> : vector<4xf32>
    %49 = vector.multi_reduction <maximumf>, %48, %cst_20 [1] : vector<4x32xf32> to vector<4xf32>
    %50 = vector.shape_cast %49 : vector<4xf32> to vector<4x1xf32>
    %51 = vector.broadcast %50 : vector<4x1xf32> to vector<4x32xf32>
    %52 = arith.subf %48, %51 : vector<4x32xf32>
    %53 = math.exp %52 : vector<4x32xf32>
    %cst_21 = arith.constant dense<0.000000e+00> : vector<4xf32>
    %54 = vector.multi_reduction <add>, %53, %cst_21 [1] : vector<4x32xf32> to vector<4xf32>
    %55 = vector.shape_cast %54 : vector<4xf32> to vector<4x1xf32>
    %56 = tpu.reciprocal %55 {approx = true} : vector<4x1xf32> -> vector<4x1xf32>
    %57 = vector.broadcast %56 : vector<4x1xf32> to vector<4x32xf32>
    %58 = arith.mulf %53, %57 : vector<4x32xf32>
    %c0_22 = arith.constant 0 : index
    %c0_23 = arith.constant 0 : index
    %59 = vector.load %arg7[%c0_22, %c0_23] : memref<4x4xf32, #tpu.memory_space<vmem>>, vector<4x4xf32>
    %60 = arith.truncf %59 : vector<4x4xf32> to vector<4x4xbf16>
    %61 = arith.truncf %58 : vector<4x32xf32> to vector<4x32xbf16>
    %cst_24 = arith.constant dense<0.000000e+00> : vector<4x32xf32>
    %62 = tpu.matmul %60, %61, %cst_24 {dimension_numbers = #tpu.dot_dimension_numbers<[1], [0], [0], [1], [0, 0, 1, 1], [], []>} : vector<4x4xbf16>, vector<4x32xbf16>, vector<4x32xf32> -> vector<4x32xf32>
    %63 = arith.truncf %62 : vector<4x32xf32> to vector<4x32xbf16>
    %cst_25 = arith.constant dense<0.000000e+00> : vector<4x64xf32>
    %64 = tpu.matmul %63, %13, %cst_25 {dimension_numbers = #tpu.dot_dimension_numbers<[1], [0], [0], [1], [0, 0, 1, 1], [], []>} : vector<4x32xbf16>, vector<32x64xbf16>, vector<4x64xf32> -> vector<4x64xf32>
    %c0_26 = arith.constant 0 : index
    %c0_27 = arith.constant 0 : index
    %c0_28 = arith.constant 0 : index
    %65 = vector.load %arg11[%c0_26, %c0_27, %c0_28] : memref<2x4x64xf32, #tpu.memory_space<vmem>>, vector<1x4x64xf32>
    %66 = vector.shape_cast %65 : vector<1x4x64xf32> to vector<4x64xf32>
    %67 = vector.shape_cast %64 : vector<4x64xf32> to vector<1x4x64xf32>
    tpu.vector_store %arg11[%c0_26, %c0_27, %c0_28], %67 {strides = array<i32>} : memref<2x4x64xf32, #tpu.memory_space<vmem>>, vector<1x4x64xf32>,
    %c0_29 = arith.constant 0 : index
    %c0_30 = arith.constant 0 : index
    %c0_31 = arith.constant 0 : index
    %68 = vector.load %arg2[%c0_29, %c0_30, %c0_31] : memref<2x8x64xf32, #tpu.memory_space<vmem>>, vector<1x8x64xf32>
    %69 = vector.shape_cast %68 : vector<1x8x64xf32> to vector<8x64xf32>
    %70 = arith.mulf %69, %69 : vector<8x64xf32>
    %cst_32 = arith.constant dense<0.000000e+00> : vector<8xf32>
    %71 = vector.multi_reduction <add>, %70, %cst_32 [1] : vector<8x64xf32> to vector<8xf32>
    %72 = vector.shape_cast %71 : vector<8xf32> to vector<8x1xf32>
    %cst_33 = arith.constant 1.000000e-24 : f32
    %73 = vector.broadcast %cst_33 : f32 to vector<8x1xf32>
    %74 = arith.maximumf %72, %73 : vector<8x1xf32>
    %75 = math.rsqrt %74 : vector<8x1xf32>
    %76 = vector.broadcast %75 : vector<8x1xf32> to vector<8x64xf32>
    %77 = arith.mulf %69, %76 : vector<8x64xf32>
    %78 = arith.truncf %77 : vector<8x64xf32> to vector<8x64xbf16>
    %cst_34 = arith.constant dense<0.000000e+00> : vector<8x32xf32>
    %79 = tpu.matmul %78, %10, %cst_34 {dimension_numbers = #tpu.dot_dimension_numbers<[1], [1], [0], [0], [0, 0, 1, 0], [], []>} : vector<8x64xbf16>, vector<32x64xbf16>, vector<8x32xf32> -> vector<8x32xf32>
    %80 = vector.shape_cast %79 : vector<8x32xf32> to vector<1x8x32xf32>
    %cst_35 = arith.constant dense<0.000000e+00> : vector<1xf32>
    %81 = vector.multi_reduction <add>, %80, %cst_35 [1, 2] : vector<1x8x32xf32> to vector<1xf32>
    %82 = vector.shape_cast %81 : vector<1xf32> to vector<1x1x1xf32>
    %83 = vector.extract %82[0, 0, 0] : f32 from vector<1x1x1xf32>
    %cst_36 = arith.constant 3.906250e-03 : f32
    %84 = arith.mulf %83, %cst_36 : f32
    %85 = arith.mulf %79, %79 : vector<8x32xf32>
    %86 = vector.shape_cast %85 : vector<8x32xf32> to vector<1x8x32xf32>
    %cst_37 = arith.constant dense<0.000000e+00> : vector<1xf32>
    %87 = vector.multi_reduction <add>, %86, %cst_37 [1, 2] : vector<1x8x32xf32> to vector<1xf32>
    %88 = vector.shape_cast %87 : vector<1xf32> to vector<1x1x1xf32>
    %89 = vector.extract %88[0, 0, 0] : f32 from vector<1x1x1xf32>
    %cst_38 = arith.constant 3.906250e-03 : f32
    %90 = arith.mulf %89, %cst_38 : f32
    %cst_39 = arith.constant 0.176776692 : f32
    %91 = arith.mulf %cst_39, %84 : f32
    %cst_40 = arith.constant 3.125000e-02 : f32
    %92 = arith.mulf %cst_40, %90 : f32
    %93 = arith.mulf %91, %91 : f32
    %94 = arith.subf %92, %93 : f32
    %cst_41 = arith.constant 9.99999974E-6 : f32
    %95 = arith.addf %94, %cst_41 : f32
    %96 = math.rsqrt %95 : f32
    %cst_42 = arith.constant 0.176776692 : f32
    %97 = arith.mulf %cst_42, %96 : f32
    %98 = vector.broadcast %97 : f32 to vector<8x32xf32>
    %99 = arith.mulf %79, %98 : vector<8x32xf32>
    %100 = arith.mulf %91, %96 : f32
    %101 = vector.broadcast %100 : f32 to vector<8x32xf32>
    %102 = arith.subf %99, %101 : vector<8x32xf32>
    %cst_43 = arith.constant dense<0xFF800000> : vector<8xf32>
    %103 = vector.multi_reduction <maximumf>, %102, %cst_43 [1] : vector<8x32xf32> to vector<8xf32>
    %104 = vector.shape_cast %103 : vector<8xf32> to vector<8x1xf32>
    %105 = vector.broadcast %104 : vector<8x1xf32> to vector<8x32xf32>
    %106 = arith.subf %102, %105 : vector<8x32xf32>
    %107 = math.exp %106 : vector<8x32xf32>
    %cst_44 = arith.constant dense<0.000000e+00> : vector<8xf32>
    %108 = vector.multi_reduction <add>, %107, %cst_44 [1] : vector<8x32xf32> to vector<8xf32>
    %109 = vector.shape_cast %108 : vector<8xf32> to vector<8x1xf32>
    %110 = tpu.reciprocal %109 {approx = true} : vector<8x1xf32> -> vector<8x1xf32>
    %111 = vector.broadcast %110 : vector<8x1xf32> to vector<8x32xf32>
    %112 = arith.mulf %107, %111 : vector<8x32xf32>
    %c0_45 = arith.constant 0 : index
    %c0_46 = arith.constant 0 : index
    %113 = vector.load %arg8[%c0_45, %c0_46] : memref<8x8xf32, #tpu.memory_space<vmem>>, vector<8x8xf32>
    %114 = arith.truncf %113 : vector<8x8xf32> to vector<8x8xbf16>
    %115 = arith.truncf %112 : vector<8x32xf32> to vector<8x32xbf16>
    %cst_47 = arith.constant dense<0.000000e+00> : vector<8x32xf32>
    %116 = tpu.matmul %114, %115, %cst_47 {dimension_numbers = #tpu.dot_dimension_numbers<[1], [0], [0], [1], [0, 0, 1, 1], [], []>} : vector<8x8xbf16>, vector<8x32xbf16>, vector<8x32xf32> -> vector<8x32xf32>
    %117 = arith.truncf %116 : vector<8x32xf32> to vector<8x32xbf16>
    %cst_48 = arith.constant dense<0.000000e+00> : vector<8x64xf32>
    %118 = tpu.matmul %117, %13, %cst_48 {dimension_numbers = #tpu.dot_dimension_numbers<[1], [0], [0], [1], [0, 0, 1, 1], [], []>} : vector<8x32xbf16>, vector<32x64xbf16>, vector<8x64xf32> -> vector<8x64xf32>
    %c0_49 = arith.constant 0 : index
    %c0_50 = arith.constant 0 : index
    %c0_51 = arith.constant 0 : index
    %119 = vector.load %arg12[%c0_49, %c0_50, %c0_51] : memref<2x8x64xf32, #tpu.memory_space<vmem>>, vector<1x8x64xf32>
    %120 = vector.shape_cast %119 : vector<1x8x64xf32> to vector<8x64xf32>
    %121 = vector.shape_cast %118 : vector<8x64xf32> to vector<1x8x64xf32>
    tpu.vector_store %arg12[%c0_49, %c0_50, %c0_51], %121 {strides = array<i32>} : memref<2x8x64xf32, #tpu.memory_space<vmem>>, vector<1x8x64xf32>,
    %c0_52 = arith.constant 0 : index
    %c0_53 = arith.constant 0 : index
    %c0_54 = arith.constant 0 : index
    %122 = vector.load %arg3[%c0_52, %c0_53, %c0_54] : memref<2x8x64xf32, #tpu.memory_space<vmem>>, vector<1x8x64xf32>
    %123 = vector.shape_cast %122 : vector<1x8x64xf32> to vector<8x64xf32>
    %124 = arith.mulf %123, %123 : vector<8x64xf32>
    %cst_55 = arith.constant dense<0.000000e+00> : vector<8xf32>
    %125 = vector.multi_reduction <add>, %124, %cst_55 [1] : vector<8x64xf32> to vector<8xf32>
    %126 = vector.shape_cast %125 : vector<8xf32> to vector<8x1xf32>
    %cst_56 = arith.constant 1.000000e-24 : f32
    %127 = vector.broadcast %cst_56 : f32 to vector<8x1xf32>
    %128 = arith.maximumf %126, %127 : vector<8x1xf32>
    %129 = math.rsqrt %128 : vector<8x1xf32>
    %130 = vector.broadcast %129 : vector<8x1xf32> to vector<8x64xf32>
    %131 = arith.mulf %123, %130 : vector<8x64xf32>
    %132 = arith.truncf %131 : vector<8x64xf32> to vector<8x64xbf16>
    %cst_57 = arith.constant dense<0.000000e+00> : vector<8x32xf32>
    %133 = tpu.matmul %132, %10, %cst_57 {dimension_numbers = #tpu.dot_dimension_numbers<[1], [1], [0], [0], [0, 0, 1, 0], [], []>} : vector<8x64xbf16>, vector<32x64xbf16>, vector<8x32xf32> -> vector<8x32xf32>
    %134 = vector.shape_cast %133 : vector<8x32xf32> to vector<1x8x32xf32>
    %cst_58 = arith.constant dense<0.000000e+00> : vector<1xf32>
    %135 = vector.multi_reduction <add>, %134, %cst_58 [1, 2] : vector<1x8x32xf32> to vector<1xf32>
    %136 = vector.shape_cast %135 : vector<1xf32> to vector<1x1x1xf32>
    %137 = vector.extract %136[0, 0, 0] : f32 from vector<1x1x1xf32>
    %cst_59 = arith.constant 3.906250e-03 : f32
    %138 = arith.mulf %137, %cst_59 : f32
    %139 = arith.mulf %133, %133 : vector<8x32xf32>
    %140 = vector.shape_cast %139 : vector<8x32xf32> to vector<1x8x32xf32>
    %cst_60 = arith.constant dense<0.000000e+00> : vector<1xf32>
    %141 = vector.multi_reduction <add>, %140, %cst_60 [1, 2] : vector<1x8x32xf32> to vector<1xf32>
    %142 = vector.shape_cast %141 : vector<1xf32> to vector<1x1x1xf32>
    %143 = vector.extract %142[0, 0, 0] : f32 from vector<1x1x1xf32>
    %cst_61 = arith.constant 3.906250e-03 : f32
    %144 = arith.mulf %143, %cst_61 : f32
    %cst_62 = arith.constant 0.176776692 : f32
    %145 = arith.mulf %cst_62, %138 : f32
    %cst_63 = arith.constant 3.125000e-02 : f32
    %146 = arith.mulf %cst_63, %144 : f32
    %147 = arith.mulf %145, %145 : f32
    %148 = arith.subf %146, %147 : f32
    %cst_64 = arith.constant 9.99999974E-6 : f32
    %149 = arith.addf %148, %cst_64 : f32
    %150 = math.rsqrt %149 : f32
    %cst_65 = arith.constant 0.176776692 : f32
    %151 = arith.mulf %cst_65, %150 : f32
    %152 = vector.broadcast %151 : f32 to vector<8x32xf32>
    %153 = arith.mulf %133, %152 : vector<8x32xf32>
    %154 = arith.mulf %145, %150 : f32
    %155 = vector.broadcast %154 : f32 to vector<8x32xf32>
    %156 = arith.subf %153, %155 : vector<8x32xf32>
    %cst_66 = arith.constant dense<0xFF800000> : vector<8xf32>
    %157 = vector.multi_reduction <maximumf>, %156, %cst_66 [1] : vector<8x32xf32> to vector<8xf32>
    %158 = vector.shape_cast %157 : vector<8xf32> to vector<8x1xf32>
    %159 = vector.broadcast %158 : vector<8x1xf32> to vector<8x32xf32>
    %160 = arith.subf %156, %159 : vector<8x32xf32>
    %161 = math.exp %160 : vector<8x32xf32>
    %cst_67 = arith.constant dense<0.000000e+00> : vector<8xf32>
    %162 = vector.multi_reduction <add>, %161, %cst_67 [1] : vector<8x32xf32> to vector<8xf32>
    %163 = vector.shape_cast %162 : vector<8xf32> to vector<8x1xf32>
    %164 = tpu.reciprocal %163 {approx = true} : vector<8x1xf32> -> vector<8x1xf32>
    %165 = vector.broadcast %164 : vector<8x1xf32> to vector<8x32xf32>
    %166 = arith.mulf %161, %165 : vector<8x32xf32>
    %c0_68 = arith.constant 0 : index
    %c0_69 = arith.constant 0 : index
    %167 = vector.load %arg9[%c0_68, %c0_69] : memref<8x8xf32, #tpu.memory_space<vmem>>, vector<8x8xf32>
    %168 = arith.truncf %167 : vector<8x8xf32> to vector<8x8xbf16>
    %169 = arith.truncf %166 : vector<8x32xf32> to vector<8x32xbf16>
    %cst_70 = arith.constant dense<0.000000e+00> : vector<8x32xf32>
    %170 = tpu.matmul %168, %169, %cst_70 {dimension_numbers = #tpu.dot_dimension_numbers<[1], [0], [0], [1], [0, 0, 1, 1], [], []>} : vector<8x8xbf16>, vector<8x32xbf16>, vector<8x32xf32> -> vector<8x32xf32>
    %171 = arith.truncf %170 : vector<8x32xf32> to vector<8x32xbf16>
    %cst_71 = arith.constant dense<0.000000e+00> : vector<8x64xf32>
    %172 = tpu.matmul %171, %13, %cst_71 {dimension_numbers = #tpu.dot_dimension_numbers<[1], [0], [0], [1], [0, 0, 1, 1], [], []>} : vector<8x32xbf16>, vector<32x64xbf16>, vector<8x64xf32> -> vector<8x64xf32>
    %c0_72 = arith.constant 0 : index
    %c0_73 = arith.constant 0 : index
    %c0_74 = arith.constant 0 : index
    %173 = vector.load %arg13[%c0_72, %c0_73, %c0_74] : memref<2x8x64xf32, #tpu.memory_space<vmem>>, vector<1x8x64xf32>
    %174 = vector.shape_cast %173 : vector<1x8x64xf32> to vector<8x64xf32>
    %175 = vector.shape_cast %172 : vector<8x64xf32> to vector<1x8x64xf32>
    tpu.vector_store %arg13[%c0_72, %c0_73, %c0_74], %175 {strides = array<i32>} : memref<2x8x64xf32, #tpu.memory_space<vmem>>, vector<1x8x64xf32>,
    %c0_75 = arith.constant 0 : index
    %c0_76 = arith.constant 0 : index
    %c0_77 = arith.constant 0 : index
    %176 = vector.load %arg4[%c0_75, %c0_76, %c0_77] : memref<2x12x64xf32, #tpu.memory_space<vmem>>, vector<1x12x64xf32>
    %177 = vector.shape_cast %176 : vector<1x12x64xf32> to vector<12x64xf32>
    %178 = arith.mulf %177, %177 : vector<12x64xf32>
    %cst_78 = arith.constant dense<0.000000e+00> : vector<12xf32>
    %179 = vector.multi_reduction <add>, %178, %cst_78 [1] : vector<12x64xf32> to vector<12xf32>
    %180 = vector.shape_cast %179 : vector<12xf32> to vector<12x1xf32>
    %cst_79 = arith.constant 1.000000e-24 : f32
    %181 = vector.broadcast %cst_79 : f32 to vector<12x1xf32>
    %182 = arith.maximumf %180, %181 : vector<12x1xf32>
    %183 = math.rsqrt %182 : vector<12x1xf32>
    %184 = vector.broadcast %183 : vector<12x1xf32> to vector<12x64xf32>
    %185 = arith.mulf %177, %184 : vector<12x64xf32>
    %186 = arith.truncf %185 : vector<12x64xf32> to vector<12x64xbf16>
    %cst_80 = arith.constant dense<0.000000e+00> : vector<12x32xf32>
    %187 = tpu.matmul %186, %10, %cst_80 {dimension_numbers = #tpu.dot_dimension_numbers<[1], [1], [0], [0], [0, 0, 1, 0], [], []>} : vector<12x64xbf16>, vector<32x64xbf16>, vector<12x32xf32> -> vector<12x32xf32>
    %188 = vector.shape_cast %187 : vector<12x32xf32> to vector<1x12x32xf32>
    %cst_81 = arith.constant dense<0.000000e+00> : vector<1xf32>
    %189 = vector.multi_reduction <add>, %188, %cst_81 [1, 2] : vector<1x12x32xf32> to vector<1xf32>
    %190 = vector.shape_cast %189 : vector<1xf32> to vector<1x1x1xf32>
    %191 = vector.extract %190[0, 0, 0] : f32 from vector<1x1x1xf32>
    %cst_82 = arith.constant 0.00260416674 : f32
    %192 = arith.mulf %191, %cst_82 : f32
    %193 = arith.mulf %187, %187 : vector<12x32xf32>
    %194 = vector.shape_cast %193 : vector<12x32xf32> to vector<1x12x32xf32>
    %cst_83 = arith.constant dense<0.000000e+00> : vector<1xf32>
    %195 = vector.multi_reduction <add>, %194, %cst_83 [1, 2] : vector<1x12x32xf32> to vector<1xf32>
    %196 = vector.shape_cast %195 : vector<1xf32> to vector<1x1x1xf32>
    %197 = vector.extract %196[0, 0, 0] : f32 from vector<1x1x1xf32>
    %cst_84 = arith.constant 0.00260416674 : f32
    %198 = arith.mulf %197, %cst_84 : f32
    %cst_85 = arith.constant 0.176776692 : f32
    %199 = arith.mulf %cst_85, %192 : f32
    %cst_86 = arith.constant 3.125000e-02 : f32
    %200 = arith.mulf %cst_86, %198 : f32
    %201 = arith.mulf %199, %199 : f32
    %202 = arith.subf %200, %201 : f32
    %cst_87 = arith.constant 9.99999974E-6 : f32
    %203 = arith.addf %202, %cst_87 : f32
    %204 = math.rsqrt %203 : f32
    %cst_88 = arith.constant 0.176776692 : f32
    %205 = arith.mulf %cst_88, %204 : f32
    %206 = vector.broadcast %205 : f32 to vector<12x32xf32>
    %207 = arith.mulf %187, %206 : vector<12x32xf32>
    %208 = arith.mulf %199, %204 : f32
    %209 = vector.broadcast %208 : f32 to vector<12x32xf32>
    %210 = arith.subf %207, %209 : vector<12x32xf32>
    %cst_89 = arith.constant dense<0xFF800000> : vector<12xf32>
    %211 = vector.multi_reduction <maximumf>, %210, %cst_89 [1] : vector<12x32xf32> to vector<12xf32>
    %212 = vector.shape_cast %211 : vector<12xf32> to vector<12x1xf32>
    %213 = vector.broadcast %212 : vector<12x1xf32> to vector<12x32xf32>
    %214 = arith.subf %210, %213 : vector<12x32xf32>
    %215 = math.exp %214 : vector<12x32xf32>
    %cst_90 = arith.constant dense<0.000000e+00> : vector<12xf32>
    %216 = vector.multi_reduction <add>, %215, %cst_90 [1] : vector<12x32xf32> to vector<12xf32>
    %217 = vector.shape_cast %216 : vector<12xf32> to vector<12x1xf32>
    %218 = tpu.reciprocal %217 {approx = true} : vector<12x1xf32> -> vector<12x1xf32>
    %219 = vector.broadcast %218 : vector<12x1xf32> to vector<12x32xf32>
    %220 = arith.mulf %215, %219 : vector<12x32xf32>
    %c0_91 = arith.constant 0 : index
    %c0_92 = arith.constant 0 : index
    %221 = vector.load %arg10[%c0_91, %c0_92] : memref<12x12xf32, #tpu.memory_space<vmem>>, vector<12x12xf32>
    %222 = arith.truncf %221 : vector<12x12xf32> to vector<12x12xbf16>
    %223 = arith.truncf %220 : vector<12x32xf32> to vector<12x32xbf16>
    %cst_93 = arith.constant dense<0.000000e+00> : vector<12x32xf32>
    %224 = tpu.matmul %222, %223, %cst_93 {dimension_numbers = #tpu.dot_dimension_numbers<[1], [0], [0], [1], [0, 0, 1, 1], [], []>} : vector<12x12xbf16>, vector<12x32xbf16>, vector<12x32xf32> -> vector<12x32xf32>
    %225 = arith.truncf %224 : vector<12x32xf32> to vector<12x32xbf16>
    %cst_94 = arith.constant dense<0.000000e+00> : vector<12x64xf32>
    %226 = tpu.matmul %225, %13, %cst_94 {dimension_numbers = #tpu.dot_dimension_numbers<[1], [0], [0], [1], [0, 0, 1, 1], [], []>} : vector<12x32xbf16>, vector<32x64xbf16>, vector<12x64xf32> -> vector<12x64xf32>
    %c0_95 = arith.constant 0 : index
    %c0_96 = arith.constant 0 : index
    %c0_97 = arith.constant 0 : index
    %227 = vector.load %arg14[%c0_95, %c0_96, %c0_97] : memref<2x12x64xf32, #tpu.memory_space<vmem>>, vector<1x12x64xf32>
    %228 = vector.shape_cast %227 : vector<1x12x64xf32> to vector<12x64xf32>
    %229 = vector.shape_cast %226 : vector<12x64xf32> to vector<1x12x64xf32>
    tpu.vector_store %arg14[%c0_95, %c0_96, %c0_97], %229 {strides = array<i32>} : memref<2x12x64xf32, #tpu.memory_space<vmem>>, vector<1x12x64xf32>,
    %c1 = arith.constant 1 : index
    %c0_98 = arith.constant 0 : index
    %c0_99 = arith.constant 0 : index
    %230 = vector.load %arg5[%c1, %c0_98, %c0_99] : memref<2x32x64xf32, #tpu.memory_space<vmem>>, vector<1x32x64xf32>
    %231 = vector.shape_cast %230 : vector<1x32x64xf32> to vector<32x64xf32>
    %232 = arith.mulf %231, %231 : vector<32x64xf32>
    %cst_100 = arith.constant dense<0.000000e+00> : vector<32xf32>
    %233 = vector.multi_reduction <add>, %232, %cst_100 [1] : vector<32x64xf32> to vector<32xf32>
    %234 = vector.shape_cast %233 : vector<32xf32> to vector<32x1xf32>
    %cst_101 = arith.constant 1.000000e-24 : f32
    %235 = vector.broadcast %cst_101 : f32 to vector<32x1xf32>
    %236 = arith.maximumf %234, %235 : vector<32x1xf32>
    %237 = math.rsqrt %236 : vector<32x1xf32>
    %238 = vector.broadcast %237 : vector<32x1xf32> to vector<32x64xf32>
    %239 = arith.mulf %231, %238 : vector<32x64xf32>
    %240 = arith.truncf %239 : vector<32x64xf32> to vector<32x64xbf16>
    %c1_102 = arith.constant 1 : index
    %c0_103 = arith.constant 0 : index
    %c0_104 = arith.constant 0 : index
    %241 = vector.load %arg6[%c1_102, %c0_103, %c0_104] : memref<2x32x64xf32, #tpu.memory_space<vmem>>, vector<1x32x64xf32>
    %242 = vector.shape_cast %241 : vector<1x32x64xf32> to vector<32x64xf32>
    %243 = arith.truncf %242 : vector<32x64xf32> to vector<32x64xbf16>
    %c1_105 = arith.constant 1 : index
    %c0_106 = arith.constant 0 : index
    %c0_107 = arith.constant 0 : index
    %244 = vector.load %arg1[%c1_105, %c0_106, %c0_107] : memref<2x4x64xf32, #tpu.memory_space<vmem>>, vector<1x4x64xf32>
    %245 = vector.shape_cast %244 : vector<1x4x64xf32> to vector<4x64xf32>
    %246 = arith.mulf %245, %245 : vector<4x64xf32>
    %cst_108 = arith.constant dense<0.000000e+00> : vector<4xf32>
    %247 = vector.multi_reduction <add>, %246, %cst_108 [1] : vector<4x64xf32> to vector<4xf32>
    %248 = vector.shape_cast %247 : vector<4xf32> to vector<4x1xf32>
    %cst_109 = arith.constant 1.000000e-24 : f32
    %249 = vector.broadcast %cst_109 : f32 to vector<4x1xf32>
    %250 = arith.maximumf %248, %249 : vector<4x1xf32>
    %251 = math.rsqrt %250 : vector<4x1xf32>
    %252 = vector.broadcast %251 : vector<4x1xf32> to vector<4x64xf32>
    %253 = arith.mulf %245, %252 : vector<4x64xf32>
    %254 = arith.truncf %253 : vector<4x64xf32> to vector<4x64xbf16>
    %cst_110 = arith.constant dense<0.000000e+00> : vector<4x32xf32>
    %255 = tpu.matmul %254, %240, %cst_110 {dimension_numbers = #tpu.dot_dimension_numbers<[1], [1], [0], [0], [0, 0, 1, 0], [], []>} : vector<4x64xbf16>, vector<32x64xbf16>, vector<4x32xf32> -> vector<4x32xf32>
    %256 = vector.shape_cast %255 : vector<4x32xf32> to vector<1x4x32xf32>
    %cst_111 = arith.constant dense<0.000000e+00> : vector<1xf32>
    %257 = vector.multi_reduction <add>, %256, %cst_111 [1, 2] : vector<1x4x32xf32> to vector<1xf32>
    %258 = vector.shape_cast %257 : vector<1xf32> to vector<1x1x1xf32>
    %259 = vector.extract %258[0, 0, 0] : f32 from vector<1x1x1xf32>
    %cst_112 = arith.constant 7.812500e-03 : f32
    %260 = arith.mulf %259, %cst_112 : f32
    %261 = arith.mulf %255, %255 : vector<4x32xf32>
    %262 = vector.shape_cast %261 : vector<4x32xf32> to vector<1x4x32xf32>
    %cst_113 = arith.constant dense<0.000000e+00> : vector<1xf32>
    %263 = vector.multi_reduction <add>, %262, %cst_113 [1, 2] : vector<1x4x32xf32> to vector<1xf32>
    %264 = vector.shape_cast %263 : vector<1xf32> to vector<1x1x1xf32>
    %265 = vector.extract %264[0, 0, 0] : f32 from vector<1x1x1xf32>
    %cst_114 = arith.constant 7.812500e-03 : f32
    %266 = arith.mulf %265, %cst_114 : f32
    %cst_115 = arith.constant 0.176776692 : f32
    %267 = arith.mulf %cst_115, %260 : f32
    %cst_116 = arith.constant 3.125000e-02 : f32
    %268 = arith.mulf %cst_116, %266 : f32
    %269 = arith.mulf %267, %267 : f32
    %270 = arith.subf %268, %269 : f32
    %cst_117 = arith.constant 9.99999974E-6 : f32
    %271 = arith.addf %270, %cst_117 : f32
    %272 = math.rsqrt %271 : f32
    %cst_118 = arith.constant 0.176776692 : f32
    %273 = arith.mulf %cst_118, %272 : f32
    %274 = vector.broadcast %273 : f32 to vector<4x32xf32>
    %275 = arith.mulf %255, %274 : vector<4x32xf32>
    %276 = arith.mulf %267, %272 : f32
    %277 = vector.broadcast %276 : f32 to vector<4x32xf32>
    %278 = arith.subf %275, %277 : vector<4x32xf32>
    %cst_119 = arith.constant dense<0xFF800000> : vector<4xf32>
    %279 = vector.multi_reduction <maximumf>, %278, %cst_119 [1] : vector<4x32xf32> to vector<4xf32>
    %280 = vector.shape_cast %279 : vector<4xf32> to vector<4x1xf32>
    %281 = vector.broadcast %280 : vector<4x1xf32> to vector<4x32xf32>
    %282 = arith.subf %278, %281 : vector<4x32xf32>
    %283 = math.exp %282 : vector<4x32xf32>
    %cst_120 = arith.constant dense<0.000000e+00> : vector<4xf32>
    %284 = vector.multi_reduction <add>, %283, %cst_120 [1] : vector<4x32xf32> to vector<4xf32>
    %285 = vector.shape_cast %284 : vector<4xf32> to vector<4x1xf32>
    %286 = tpu.reciprocal %285 {approx = true} : vector<4x1xf32> -> vector<4x1xf32>
    %287 = vector.broadcast %286 : vector<4x1xf32> to vector<4x32xf32>
    %288 = arith.mulf %283, %287 : vector<4x32xf32>
    %c0_121 = arith.constant 0 : index
    %c0_122 = arith.constant 0 : index
    %289 = vector.load %arg7[%c0_121, %c0_122] : memref<4x4xf32, #tpu.memory_space<vmem>>, vector<4x4xf32>
    %290 = arith.truncf %289 : vector<4x4xf32> to vector<4x4xbf16>
    %291 = arith.truncf %288 : vector<4x32xf32> to vector<4x32xbf16>
    %cst_123 = arith.constant dense<0.000000e+00> : vector<4x32xf32>
    %292 = tpu.matmul %290, %291, %cst_123 {dimension_numbers = #tpu.dot_dimension_numbers<[1], [0], [0], [1], [0, 0, 1, 1], [], []>} : vector<4x4xbf16>, vector<4x32xbf16>, vector<4x32xf32> -> vector<4x32xf32>
    %293 = arith.truncf %292 : vector<4x32xf32> to vector<4x32xbf16>
    %cst_124 = arith.constant dense<0.000000e+00> : vector<4x64xf32>
    %294 = tpu.matmul %293, %243, %cst_124 {dimension_numbers = #tpu.dot_dimension_numbers<[1], [0], [0], [1], [0, 0, 1, 1], [], []>} : vector<4x32xbf16>, vector<32x64xbf16>, vector<4x64xf32> -> vector<4x64xf32>
    %c1_125 = arith.constant 1 : index
    %c0_126 = arith.constant 0 : index
    %c0_127 = arith.constant 0 : index
    %295 = vector.load %arg11[%c1_125, %c0_126, %c0_127] : memref<2x4x64xf32, #tpu.memory_space<vmem>>, vector<1x4x64xf32>
    %296 = vector.shape_cast %295 : vector<1x4x64xf32> to vector<4x64xf32>
    %297 = vector.shape_cast %294 : vector<4x64xf32> to vector<1x4x64xf32>
    tpu.vector_store %arg11[%c1_125, %c0_126, %c0_127], %297 {strides = array<i32>} : memref<2x4x64xf32, #tpu.memory_space<vmem>>, vector<1x4x64xf32>,
    %c1_128 = arith.constant 1 : index
    %c0_129 = arith.constant 0 : index
    %c0_130 = arith.constant 0 : index
    %298 = vector.load %arg2[%c1_128, %c0_129, %c0_130] : memref<2x8x64xf32, #tpu.memory_space<vmem>>, vector<1x8x64xf32>
    %299 = vector.shape_cast %298 : vector<1x8x64xf32> to vector<8x64xf32>
    %300 = arith.mulf %299, %299 : vector<8x64xf32>
    %cst_131 = arith.constant dense<0.000000e+00> : vector<8xf32>
    %301 = vector.multi_reduction <add>, %300, %cst_131 [1] : vector<8x64xf32> to vector<8xf32>
    %302 = vector.shape_cast %301 : vector<8xf32> to vector<8x1xf32>
    %cst_132 = arith.constant 1.000000e-24 : f32
    %303 = vector.broadcast %cst_132 : f32 to vector<8x1xf32>
    %304 = arith.maximumf %302, %303 : vector<8x1xf32>
    %305 = math.rsqrt %304 : vector<8x1xf32>
    %306 = vector.broadcast %305 : vector<8x1xf32> to vector<8x64xf32>
    %307 = arith.mulf %299, %306 : vector<8x64xf32>
    %308 = arith.truncf %307 : vector<8x64xf32> to vector<8x64xbf16>
    %cst_133 = arith.constant dense<0.000000e+00> : vector<8x32xf32>
    %309 = tpu.matmul %308, %240, %cst_133 {dimension_numbers = #tpu.dot_dimension_numbers<[1], [1], [0], [0], [0, 0, 1, 0], [], []>} : vector<8x64xbf16>, vector<32x64xbf16>, vector<8x32xf32> -> vector<8x32xf32>
    %310 = vector.shape_cast %309 : vector<8x32xf32> to vector<1x8x32xf32>
    %cst_134 = arith.constant dense<0.000000e+00> : vector<1xf32>
    %311 = vector.multi_reduction <add>, %310, %cst_134 [1, 2] : vector<1x8x32xf32> to vector<1xf32>
    %312 = vector.shape_cast %311 : vector<1xf32> to vector<1x1x1xf32>
    %313 = vector.extract %312[0, 0, 0] : f32 from vector<1x1x1xf32>
    %cst_135 = arith.constant 3.906250e-03 : f32
    %314 = arith.mulf %313, %cst_135 : f32
    %315 = arith.mulf %309, %309 : vector<8x32xf32>
    %316 = vector.shape_cast %315 : vector<8x32xf32> to vector<1x8x32xf32>
    %cst_136 = arith.constant dense<0.000000e+00> : vector<1xf32>
    %317 = vector.multi_reduction <add>, %316, %cst_136 [1, 2] : vector<1x8x32xf32> to vector<1xf32>
    %318 = vector.shape_cast %317 : vector<1xf32> to vector<1x1x1xf32>
    %319 = vector.extract %318[0, 0, 0] : f32 from vector<1x1x1xf32>
    %cst_137 = arith.constant 3.906250e-03 : f32
    %320 = arith.mulf %319, %cst_137 : f32
    %cst_138 = arith.constant 0.176776692 : f32
    %321 = arith.mulf %cst_138, %314 : f32
    %cst_139 = arith.constant 3.125000e-02 : f32
    %322 = arith.mulf %cst_139, %320 : f32
    %323 = arith.mulf %321, %321 : f32
    %324 = arith.subf %322, %323 : f32
    %cst_140 = arith.constant 9.99999974E-6 : f32
    %325 = arith.addf %324, %cst_140 : f32
    %326 = math.rsqrt %325 : f32
    %cst_141 = arith.constant 0.176776692 : f32
    %327 = arith.mulf %cst_141, %326 : f32
    %328 = vector.broadcast %327 : f32 to vector<8x32xf32>
    %329 = arith.mulf %309, %328 : vector<8x32xf32>
    %330 = arith.mulf %321, %326 : f32
    %331 = vector.broadcast %330 : f32 to vector<8x32xf32>
    %332 = arith.subf %329, %331 : vector<8x32xf32>
    %cst_142 = arith.constant dense<0xFF800000> : vector<8xf32>
    %333 = vector.multi_reduction <maximumf>, %332, %cst_142 [1] : vector<8x32xf32> to vector<8xf32>
    %334 = vector.shape_cast %333 : vector<8xf32> to vector<8x1xf32>
    %335 = vector.broadcast %334 : vector<8x1xf32> to vector<8x32xf32>
    %336 = arith.subf %332, %335 : vector<8x32xf32>
    %337 = math.exp %336 : vector<8x32xf32>
    %cst_143 = arith.constant dense<0.000000e+00> : vector<8xf32>
    %338 = vector.multi_reduction <add>, %337, %cst_143 [1] : vector<8x32xf32> to vector<8xf32>
    %339 = vector.shape_cast %338 : vector<8xf32> to vector<8x1xf32>
    %340 = tpu.reciprocal %339 {approx = true} : vector<8x1xf32> -> vector<8x1xf32>
    %341 = vector.broadcast %340 : vector<8x1xf32> to vector<8x32xf32>
    %342 = arith.mulf %337, %341 : vector<8x32xf32>
    %c0_144 = arith.constant 0 : index
    %c0_145 = arith.constant 0 : index
    %343 = vector.load %arg8[%c0_144, %c0_145] : memref<8x8xf32, #tpu.memory_space<vmem>>, vector<8x8xf32>
    %344 = arith.truncf %343 : vector<8x8xf32> to vector<8x8xbf16>
    %345 = arith.truncf %342 : vector<8x32xf32> to vector<8x32xbf16>
    %cst_146 = arith.constant dense<0.000000e+00> : vector<8x32xf32>
    %346 = tpu.matmul %344, %345, %cst_146 {dimension_numbers = #tpu.dot_dimension_numbers<[1], [0], [0], [1], [0, 0, 1, 1], [], []>} : vector<8x8xbf16>, vector<8x32xbf16>, vector<8x32xf32> -> vector<8x32xf32>
    %347 = arith.truncf %346 : vector<8x32xf32> to vector<8x32xbf16>
    %cst_147 = arith.constant dense<0.000000e+00> : vector<8x64xf32>
    %348 = tpu.matmul %347, %243, %cst_147 {dimension_numbers = #tpu.dot_dimension_numbers<[1], [0], [0], [1], [0, 0, 1, 1], [], []>} : vector<8x32xbf16>, vector<32x64xbf16>, vector<8x64xf32> -> vector<8x64xf32>
    %c1_148 = arith.constant 1 : index
    %c0_149 = arith.constant 0 : index
    %c0_150 = arith.constant 0 : index
    %349 = vector.load %arg12[%c1_148, %c0_149, %c0_150] : memref<2x8x64xf32, #tpu.memory_space<vmem>>, vector<1x8x64xf32>
    %350 = vector.shape_cast %349 : vector<1x8x64xf32> to vector<8x64xf32>
    %351 = vector.shape_cast %348 : vector<8x64xf32> to vector<1x8x64xf32>
    tpu.vector_store %arg12[%c1_148, %c0_149, %c0_150], %351 {strides = array<i32>} : memref<2x8x64xf32, #tpu.memory_space<vmem>>, vector<1x8x64xf32>,
    %c1_151 = arith.constant 1 : index
    %c0_152 = arith.constant 0 : index
    %c0_153 = arith.constant 0 : index
    %352 = vector.load %arg3[%c1_151, %c0_152, %c0_153] : memref<2x8x64xf32, #tpu.memory_space<vmem>>, vector<1x8x64xf32>
    %353 = vector.shape_cast %352 : vector<1x8x64xf32> to vector<8x64xf32>
    %354 = arith.mulf %353, %353 : vector<8x64xf32>
    %cst_154 = arith.constant dense<0.000000e+00> : vector<8xf32>
    %355 = vector.multi_reduction <add>, %354, %cst_154 [1] : vector<8x64xf32> to vector<8xf32>
    %356 = vector.shape_cast %355 : vector<8xf32> to vector<8x1xf32>
    %cst_155 = arith.constant 1.000000e-24 : f32
    %357 = vector.broadcast %cst_155 : f32 to vector<8x1xf32>
    %358 = arith.maximumf %356, %357 : vector<8x1xf32>
    %359 = math.rsqrt %358 : vector<8x1xf32>
    %360 = vector.broadcast %359 : vector<8x1xf32> to vector<8x64xf32>
    %361 = arith.mulf %353, %360 : vector<8x64xf32>
    %362 = arith.truncf %361 : vector<8x64xf32> to vector<8x64xbf16>
    %cst_156 = arith.constant dense<0.000000e+00> : vector<8x32xf32>
    %363 = tpu.matmul %362, %240, %cst_156 {dimension_numbers = #tpu.dot_dimension_numbers<[1], [1], [0], [0], [0, 0, 1, 0], [], []>} : vector<8x64xbf16>, vector<32x64xbf16>, vector<8x32xf32> -> vector<8x32xf32>
    %364 = vector.shape_cast %363 : vector<8x32xf32> to vector<1x8x32xf32>
    %cst_157 = arith.constant dense<0.000000e+00> : vector<1xf32>
    %365 = vector.multi_reduction <add>, %364, %cst_157 [1, 2] : vector<1x8x32xf32> to vector<1xf32>
    %366 = vector.shape_cast %365 : vector<1xf32> to vector<1x1x1xf32>
    %367 = vector.extract %366[0, 0, 0] : f32 from vector<1x1x1xf32>
    %cst_158 = arith.constant 3.906250e-03 : f32
    %368 = arith.mulf %367, %cst_158 : f32
    %369 = arith.mulf %363, %363 : vector<8x32xf32>
    %370 = vector.shape_cast %369 : vector<8x32xf32> to vector<1x8x32xf32>
    %cst_159 = arith.constant dense<0.000000e+00> : vector<1xf32>
    %371 = vector.multi_reduction <add>, %370, %cst_159 [1, 2] : vector<1x8x32xf32> to vector<1xf32>
    %372 = vector.shape_cast %371 : vector<1xf32> to vector<1x1x1xf32>
    %373 = vector.extract %372[0, 0, 0] : f32 from vector<1x1x1xf32>
    %cst_160 = arith.constant 3.906250e-03 : f32
    %374 = arith.mulf %373, %cst_160 : f32
    %cst_161 = arith.constant 0.176776692 : f32
    %375 = arith.mulf %cst_161, %368 : f32
    %cst_162 = arith.constant 3.125000e-02 : f32
    %376 = arith.mulf %cst_162, %374 : f32
    %377 = arith.mulf %375, %375 : f32
    %378 = arith.subf %376, %377 : f32
    %cst_163 = arith.constant 9.99999974E-6 : f32
    %379 = arith.addf %378, %cst_163 : f32
    %380 = math.rsqrt %379 : f32
    %cst_164 = arith.constant 0.176776692 : f32
    %381 = arith.mulf %cst_164, %380 : f32
    %382 = vector.broadcast %381 : f32 to vector<8x32xf32>
    %383 = arith.mulf %363, %382 : vector<8x32xf32>
    %384 = arith.mulf %375, %380 : f32
    %385 = vector.broadcast %384 : f32 to vector<8x32xf32>
    %386 = arith.subf %383, %385 : vector<8x32xf32>
    %cst_165 = arith.constant dense<0xFF800000> : vector<8xf32>
    %387 = vector.multi_reduction <maximumf>, %386, %cst_165 [1] : vector<8x32xf32> to vector<8xf32>
    %388 = vector.shape_cast %387 : vector<8xf32> to vector<8x1xf32>
    %389 = vector.broadcast %388 : vector<8x1xf32> to vector<8x32xf32>
    %390 = arith.subf %386, %389 : vector<8x32xf32>
    %391 = math.exp %390 : vector<8x32xf32>
    %cst_166 = arith.constant dense<0.000000e+00> : vector<8xf32>
    %392 = vector.multi_reduction <add>, %391, %cst_166 [1] : vector<8x32xf32> to vector<8xf32>
    %393 = vector.shape_cast %392 : vector<8xf32> to vector<8x1xf32>
    %394 = tpu.reciprocal %393 {approx = true} : vector<8x1xf32> -> vector<8x1xf32>
    %395 = vector.broadcast %394 : vector<8x1xf32> to vector<8x32xf32>
    %396 = arith.mulf %391, %395 : vector<8x32xf32>
    %c0_167 = arith.constant 0 : index
    %c0_168 = arith.constant 0 : index
    %397 = vector.load %arg9[%c0_167, %c0_168] : memref<8x8xf32, #tpu.memory_space<vmem>>, vector<8x8xf32>
    %398 = arith.truncf %397 : vector<8x8xf32> to vector<8x8xbf16>
    %399 = arith.truncf %396 : vector<8x32xf32> to vector<8x32xbf16>
    %cst_169 = arith.constant dense<0.000000e+00> : vector<8x32xf32>
    %400 = tpu.matmul %398, %399, %cst_169 {dimension_numbers = #tpu.dot_dimension_numbers<[1], [0], [0], [1], [0, 0, 1, 1], [], []>} : vector<8x8xbf16>, vector<8x32xbf16>, vector<8x32xf32> -> vector<8x32xf32>
    %401 = arith.truncf %400 : vector<8x32xf32> to vector<8x32xbf16>
    %cst_170 = arith.constant dense<0.000000e+00> : vector<8x64xf32>
    %402 = tpu.matmul %401, %243, %cst_170 {dimension_numbers = #tpu.dot_dimension_numbers<[1], [0], [0], [1], [0, 0, 1, 1], [], []>} : vector<8x32xbf16>, vector<32x64xbf16>, vector<8x64xf32> -> vector<8x64xf32>
    %c1_171 = arith.constant 1 : index
    %c0_172 = arith.constant 0 : index
    %c0_173 = arith.constant 0 : index
    %403 = vector.load %arg13[%c1_171, %c0_172, %c0_173] : memref<2x8x64xf32, #tpu.memory_space<vmem>>, vector<1x8x64xf32>
    %404 = vector.shape_cast %403 : vector<1x8x64xf32> to vector<8x64xf32>
    %405 = vector.shape_cast %402 : vector<8x64xf32> to vector<1x8x64xf32>
    tpu.vector_store %arg13[%c1_171, %c0_172, %c0_173], %405 {strides = array<i32>} : memref<2x8x64xf32, #tpu.memory_space<vmem>>, vector<1x8x64xf32>,
    %c1_174 = arith.constant 1 : index
    %c0_175 = arith.constant 0 : index
    %c0_176 = arith.constant 0 : index
    %406 = vector.load %arg4[%c1_174, %c0_175, %c0_176] : memref<2x12x64xf32, #tpu.memory_space<vmem>>, vector<1x12x64xf32>
    %407 = vector.shape_cast %406 : vector<1x12x64xf32> to vector<12x64xf32>
    %408 = arith.mulf %407, %407 : vector<12x64xf32>
    %cst_177 = arith.constant dense<0.000000e+00> : vector<12xf32>
    %409 = vector.multi_reduction <add>, %408, %cst_177 [1] : vector<12x64xf32> to vector<12xf32>
    %410 = vector.shape_cast %409 : vector<12xf32> to vector<12x1xf32>
    %cst_178 = arith.constant 1.000000e-24 : f32
    %411 = vector.broadcast %cst_178 : f32 to vector<12x1xf32>
    %412 = arith.maximumf %410, %411 : vector<12x1xf32>
    %413 = math.rsqrt %412 : vector<12x1xf32>
    %414 = vector.broadcast %413 : vector<12x1xf32> to vector<12x64xf32>
    %415 = arith.mulf %407, %414 : vector<12x64xf32>
    %416 = arith.truncf %415 : vector<12x64xf32> to vector<12x64xbf16>
    %cst_179 = arith.constant dense<0.000000e+00> : vector<12x32xf32>
    %417 = tpu.matmul %416, %240, %cst_179 {dimension_numbers = #tpu.dot_dimension_numbers<[1], [1], [0], [0], [0, 0, 1, 0], [], []>} : vector<12x64xbf16>, vector<32x64xbf16>, vector<12x32xf32> -> vector<12x32xf32>
    %418 = vector.shape_cast %417 : vector<12x32xf32> to vector<1x12x32xf32>
    %cst_180 = arith.constant dense<0.000000e+00> : vector<1xf32>
    %419 = vector.multi_reduction <add>, %418, %cst_180 [1, 2] : vector<1x12x32xf32> to vector<1xf32>
    %420 = vector.shape_cast %419 : vector<1xf32> to vector<1x1x1xf32>
    %421 = vector.extract %420[0, 0, 0] : f32 from vector<1x1x1xf32>
    %cst_181 = arith.constant 0.00260416674 : f32
    %422 = arith.mulf %421, %cst_181 : f32
    %423 = arith.mulf %417, %417 : vector<12x32xf32>
    %424 = vector.shape_cast %423 : vector<12x32xf32> to vector<1x12x32xf32>
    %cst_182 = arith.constant dense<0.000000e+00> : vector<1xf32>
    %425 = vector.multi_reduction <add>, %424, %cst_182 [1, 2] : vector<1x12x32xf32> to vector<1xf32>
    %426 = vector.shape_cast %425 : vector<1xf32> to vector<1x1x1xf32>
    %427 = vector.extract %426[0, 0, 0] : f32 from vector<1x1x1xf32>
    %cst_183 = arith.constant 0.00260416674 : f32
    %428 = arith.mulf %427, %cst_183 : f32
    %cst_184 = arith.constant 0.176776692 : f32
    %429 = arith.mulf %cst_184, %422 : f32
    %cst_185 = arith.constant 3.125000e-02 : f32
    %430 = arith.mulf %cst_185, %428 : f32
    %431 = arith.mulf %429, %429 : f32
    %432 = arith.subf %430, %431 : f32
    %cst_186 = arith.constant 9.99999974E-6 : f32
    %433 = arith.addf %432, %cst_186 : f32
    %434 = math.rsqrt %433 : f32
    %cst_187 = arith.constant 0.176776692 : f32
    %435 = arith.mulf %cst_187, %434 : f32
    %436 = vector.broadcast %435 : f32 to vector<12x32xf32>
    %437 = arith.mulf %417, %436 : vector<12x32xf32>
    %438 = arith.mulf %429, %434 : f32
    %439 = vector.broadcast %438 : f32 to vector<12x32xf32>
    %440 = arith.subf %437, %439 : vector<12x32xf32>
    %cst_188 = arith.constant dense<0xFF800000> : vector<12xf32>
    %441 = vector.multi_reduction <maximumf>, %440, %cst_188 [1] : vector<12x32xf32> to vector<12xf32>
    %442 = vector.shape_cast %441 : vector<12xf32> to vector<12x1xf32>
    %443 = vector.broadcast %442 : vector<12x1xf32> to vector<12x32xf32>
    %444 = arith.subf %440, %443 : vector<12x32xf32>
    %445 = math.exp %444 : vector<12x32xf32>
    %cst_189 = arith.constant dense<0.000000e+00> : vector<12xf32>
    %446 = vector.multi_reduction <add>, %445, %cst_189 [1] : vector<12x32xf32> to vector<12xf32>
    %447 = vector.shape_cast %446 : vector<12xf32> to vector<12x1xf32>
    %448 = tpu.reciprocal %447 {approx = true} : vector<12x1xf32> -> vector<12x1xf32>
    %449 = vector.broadcast %448 : vector<12x1xf32> to vector<12x32xf32>
    %450 = arith.mulf %445, %449 : vector<12x32xf32>
    %c0_190 = arith.constant 0 : index
    %c0_191 = arith.constant 0 : index
    %451 = vector.load %arg10[%c0_190, %c0_191] : memref<12x12xf32, #tpu.memory_space<vmem>>, vector<12x12xf32>
    %452 = arith.truncf %451 : vector<12x12xf32> to vector<12x12xbf16>
    %453 = arith.truncf %450 : vector<12x32xf32> to vector<12x32xbf16>
    %cst_192 = arith.constant dense<0.000000e+00> : vector<12x32xf32>
    %454 = tpu.matmul %452, %453, %cst_192 {dimension_numbers = #tpu.dot_dimension_numbers<[1], [0], [0], [1], [0, 0, 1, 1], [], []>} : vector<12x12xbf16>, vector<12x32xbf16>, vector<12x32xf32> -> vector<12x32xf32>
    %455 = arith.truncf %454 : vector<12x32xf32> to vector<12x32xbf16>
    %cst_193 = arith.constant dense<0.000000e+00> : vector<12x64xf32>
    %456 = tpu.matmul %455, %243, %cst_193 {dimension_numbers = #tpu.dot_dimension_numbers<[1], [0], [0], [1], [0, 0, 1, 1], [], []>} : vector<12x32xbf16>, vector<32x64xbf16>, vector<12x64xf32> -> vector<12x64xf32>
    %c1_194 = arith.constant 1 : index
    %c0_195 = arith.constant 0 : index
    %c0_196 = arith.constant 0 : index
    %457 = vector.load %arg14[%c1_194, %c0_195, %c0_196] : memref<2x12x64xf32, #tpu.memory_space<vmem>>, vector<1x12x64xf32>
    %458 = vector.shape_cast %457 : vector<1x12x64xf32> to vector<12x64xf32>
    %459 = vector.shape_cast %456 : vector<12x64xf32> to vector<1x12x64xf32>
    tpu.vector_store %arg14[%c1_194, %c0_195, %c0_196], %459 {strides = array<i32>} : memref<2x12x64xf32, #tpu.memory_space<vmem>>, vector<1x12x64xf32>,
    return
  }
  func.func @transform_0(%arg0: i32) -> (i32, i32, i32) {
    %c0_i32 = arith.constant 0 : i32
    %c0_i32_0 = arith.constant 0 : i32
    %c0_i32_1 = arith.constant 0 : i32
    return %arg0, %c0_i32, %c0_i32_0 : i32, i32, i32
  }
  func.func @transform_1(%arg0: i32) -> (i32, i32, i32) {
    %c0_i32 = arith.constant 0 : i32
    %c0_i32_0 = arith.constant 0 : i32
    %c0_i32_1 = arith.constant 0 : i32
    return %arg0, %c0_i32, %c0_i32_0 : i32, i32, i32
  }
  func.func @transform_2(%arg0: i32) -> (i32, i32, i32) {
    %c0_i32 = arith.constant 0 : i32
    %c0_i32_0 = arith.constant 0 : i32
    %c0_i32_1 = arith.constant 0 : i32
    return %arg0, %c0_i32, %c0_i32_0 : i32, i32, i32
  }
  func.func @transform_3(%arg0: i32) -> (i32, i32, i32) {
    %c0_i32 = arith.constant 0 : i32
    %c0_i32_0 = arith.constant 0 : i32
    %c0_i32_1 = arith.constant 0 : i32
    return %arg0, %c0_i32, %c0_i32_0 : i32, i32, i32
  }
  func.func @transform_4(%arg0: i32) -> (i32, i32, i32) {
    %c0_i32 = arith.constant 0 : i32
    %c0_i32_0 = arith.constant 0 : i32
    %c0_i32_1 = arith.constant 0 : i32
    return %arg0, %c0_i32, %c0_i32_0 : i32, i32, i32
  }
  func.func @transform_5(%arg0: i32) -> (i32, i32, i32) {
    %c0_i32 = arith.constant 0 : i32
    %c0_i32_0 = arith.constant 0 : i32
    %c0_i32_1 = arith.constant 0 : i32
    return %arg0, %c0_i32, %c0_i32_0 : i32, i32, i32
  }
  func.func @transform_6(%arg0: i32) -> (i32, i32) {
    %c0_i32 = arith.constant 0 : i32
    %c0_i32_0 = arith.constant 0 : i32
    %c0_i32_1 = arith.constant 0 : i32
    return %c0_i32, %c0_i32_0 : i32, i32
  }
  func.func @transform_7(%arg0: i32) -> (i32, i32) {
    %c0_i32 = arith.constant 0 : i32
    %c0_i32_0 = arith.constant 0 : i32
    %c0_i32_1 = arith.constant 0 : i32
    return %c0_i32, %c0_i32_0 : i32, i32
  }
  func.func @transform_8(%arg0: i32) -> (i32, i32) {
    %c0_i32 = arith.constant 0 : i32
    %c0_i32_0 = arith.constant 0 : i32
    %c0_i32_1 = arith.constant 0 : i32
    return %c0_i32, %c0_i32_0 : i32, i32
  }
  func.func @transform_9(%arg0: i32) -> (i32, i32) {
    %c0_i32 = arith.constant 0 : i32
    %c0_i32_0 = arith.constant 0 : i32
    %c0_i32_1 = arith.constant 0 : i32
    return %c0_i32, %c0_i32_0 : i32, i32
  }
  func.func @transform_10(%arg0: i32) -> (i32, i32, i32) {
    %c0_i32 = arith.constant 0 : i32
    %c0_i32_0 = arith.constant 0 : i32
    %c0_i32_1 = arith.constant 0 : i32
    return %arg0, %c0_i32, %c0_i32_0 : i32, i32, i32
  }
  func.func @transform_11(%arg0: i32) -> (i32, i32, i32) {
    %c0_i32 = arith.constant 0 : i32
    %c0_i32_0 = arith.constant 0 : i32
    %c0_i32_1 = arith.constant 0 : i32
    return %arg0, %c0_i32, %c0_i32_0 : i32, i32, i32
  }
  func.func @transform_12(%arg0: i32) -> (i32, i32, i32) {
    %c0_i32 = arith.constant 0 : i32
    %c0_i32_0 = arith.constant 0 : i32
    %c0_i32_1 = arith.constant 0 : i32
    return %arg0, %c0_i32, %c0_i32_0 : i32, i32, i32
  }
  func.func @transform_13(%arg0: i32) -> (i32, i32, i32) {
    %c0_i32 = arith.constant 0 : i32
    %c0_i32_0 = arith.constant 0 : i32
    %c0_i32_1 = arith.constant 0 : i32
    return %arg0, %c0_i32, %c0_i32_0 : i32, i32, i32
  }
}

</mosaic_0001>

<llo_original>
// kernel: ssca_forward.1
$region0: #{ssca_forward.1}
  #allocation0 [shape = 'u32[]', space=smem, size = 0x4, offset = 0x4, fixed_abs, tag = 'smem constant byte address 0x4 - core index']
  #allocation1 [shape = 'u32[144,128]{1,0:T(1,128)}', space=vmem, size = 0x12000, scoped, tag = 'internal scratch']
  %s0 = inlined_call_operand.vmem [shape: f32[2,4,64], index: 0, kind: input, shape index: {}]
  %s1 = inlined_call_operand.vmem [shape: f32[2,8,64], index: 1, kind: input, shape index: {}]
  %s2 = inlined_call_operand.vmem [shape: f32[2,8,64], index: 2, kind: input, shape index: {}]
  %s3 = inlined_call_operand.vmem [shape: f32[2,12,64], index: 3, kind: input, shape index: {}]
  %s4 = inlined_call_operand.vmem [shape: f32[2,32,64], index: 4, kind: input, shape index: {}]
  %s5 = inlined_call_operand.vmem [shape: f32[2,32,64], index: 5, kind: input, shape index: {}]
  %s6 = inlined_call_operand.vmem [shape: f32[4,4], index: 6, kind: input, shape index: {}]
  %s7 = inlined_call_operand.vmem [shape: f32[8,8], index: 7, kind: input, shape index: {}]
  %s8 = inlined_call_operand.vmem [shape: f32[8,8], index: 8, kind: input, shape index: {}]
  %s9 = inlined_call_operand.vmem [shape: f32[12,12], index: 9, kind: input, shape index: {}]
  %s10 = inlined_call_operand.vmem [shape: f32[2,4,64], index: 10, kind: output, shape index: {0}]
  %s11 = inlined_call_operand.vmem [shape: f32[2,8,64], index: 11, kind: output, shape index: {1}]
  %s12 = inlined_call_operand.vmem [shape: f32[2,8,64], index: 12, kind: output, shape index: {2}]
  %s13 = inlined_call_operand.vmem [shape: f32[2,12,64], index: 13, kind: output, shape index: {3}]
  %14 = xla_tuple %s10, %s11, %s12, %s13
  %s15 = sld [smem:[#allocation0]]
  $region74: #{ssca_forward.1} parent=0
    _
  %s17 = ssub.s32 1, %s15
  %s18 = scalar_select 0, %s17, %s15
  // Predicated region
  $region2: #{ssca_forward.1} parent=0 // pred_check
    _
  $region3: #{ssca_forward.1} parent=0 // pred_check_branch
    %20 = sbr.rel (0) target = $region5
  $region4: #{ssca_forward.1} parent=0 // pred_region
    _
  $region5: #{ssca_forward.1} parent=0 // pred_fallthru
    _
  // Predicated region
  $region6: #{ssca_forward.1} parent=0 // pred_check
    _
  $region7: #{ssca_forward.1} parent=0 // pred_check_branch
    %22 = sbr.rel (0) target = $region9
  $region8: #{ssca_forward.1} parent=0 // pred_region
    _
  $region9: #{ssca_forward.1} parent=0 // pred_fallthru
    _
  // Predicated region
  $region10: #{ssca_forward.1} parent=0 // pred_check
    _
  $region11: #{ssca_forward.1} parent=0 // pred_check_branch
    %24 = sbr.rel (0) target = $region13
  $region12: #{ssca_forward.1} parent=0 // pred_region
    _
  $region13: #{ssca_forward.1} parent=0 // pred_fallthru
    _
  // Predicated region
  $region14: #{ssca_forward.1} parent=0 // pred_check
    _
  $region15: #{ssca_forward.1} parent=0 // pred_check_branch
    %26 = sbr.rel (0) target = $region17
  $region16: #{ssca_forward.1} parent=0 // pred_region
    _
  $region17: #{ssca_forward.1} parent=0 // pred_fallthru
    _
  // Predicated region
  $region18: #{ssca_forward.1} parent=0 // pred_check
    _
  $region19: #{ssca_forward.1} parent=0 // pred_check_branch
    %28 = sbr.rel (0) target = $region21
  $region20: #{ssca_forward.1} parent=0 // pred_region
    _
  $region21: #{ssca_forward.1} parent=0 // pred_fallthru
    _
  // Predicated region
  $region22: #{ssca_forward.1} parent=0 // pred_check
    _
  $region23: #{ssca_forward.1} parent=0 // pred_check_branch
    %30 = sbr.rel (0) target = $region25
  $region24: #{ssca_forward.1} parent=0 // pred_region
    _
  $region25: #{ssca_forward.1} parent=0 // pred_fallthru
    _
  // Predicated region
  $region26: #{ssca_forward.1} parent=0 // pred_check
    _
  $region27: #{ssca_forward.1} parent=0 // pred_check_branch
    %32 = sbr.rel (0) target = $region29
  $region28: #{ssca_forward.1} parent=0 // pred_region
    _
  $region29: #{ssca_forward.1} parent=0 // pred_fallthru
    _
  // Predicated region
  $region30: #{ssca_forward.1} parent=0 // pred_check
    _
  $region31: #{ssca_forward.1} parent=0 // pred_check_branch
    %34 = sbr.rel (0) target = $region33
  $region32: #{ssca_forward.1} parent=0 // pred_region
    _
  $region33: #{ssca_forward.1} parent=0 // pred_fallthru
    _
  // Predicated region
  $region34: #{ssca_forward.1} parent=0 // pred_check
    _
  $region35: #{ssca_forward.1} parent=0 // pred_check_branch
    %36 = sbr.rel (0) target = $region37
  $region36: #{ssca_forward.1} parent=0 // pred_region
    _
  $region37: #{ssca_forward.1} parent=0 // pred_fallthru
    _
  // Predicated region
  $region38: #{ssca_forward.1} parent=0 // pred_check
    _
  $region39: #{ssca_forward.1} parent=0 // pred_check_branch
    %38 = sbr.rel (0) target = $region41
  $region40: #{ssca_forward.1} parent=0 // pred_region
    _
  $region41: #{ssca_forward.1} parent=0 // pred_fallthru
    _
  %v40 = vld [vmem:[%s4] sm:$0xff]
  %v41 = vld [vmem:[%s4 + $0x8] sm:$0xff]
  %v42 = vld [vmem:[%s4 + $0x10] sm:$0xff]
  %v43 = vld [vmem:[%s4 + $0x18] sm:$0xff]
  %v44 = vmul.f32 %v40, %v40
  %v45 = vmul.f32 %v41, %v41
  %v46 = vmul.f32 %v42, %v42
  %v47 = vmul.f32 %v43, %v43
  %vm48 = vcmask 523264
  %v49 = vsel %vm48, %v44, 0.0
  %50 = vadd.xlane.f32.xlu0 %v49
  %v51 = vpop.xlane.xlu0 %50
  %v52 = vsel %vm48, %v45, 0.0
  %53 = vadd.xlane.f32.xlu0 %v52
  %v54 = vpop.xlane.xlu0 %53
  %v55 = vsel %vm48, %v46, 0.0
  %56 = vadd.xlane.f32.xlu0 %v55
  %v57 = vpop.xlane.xlu0 %56
  %v58 = vsel %vm48, %v47, 0.0
  %59 = vadd.xlane.f32.xlu0 %v58
  %v60 = vpop.xlane.xlu0 %59
  %v61 = vmax.f32 %v51, 1e-24
  %v62 = vmax.f32 %v54, 1e-24
  %v63 = vmax.f32 %v57, 1e-24
  %v64 = vmax.f32 %v60, 1e-24
  %v65 = vrsqrt.pop %v61
  %v66 = vrsqrt.pop %v62
  %v67 = vrsqrt.pop %v63
  %v68 = vrsqrt.pop %v64
  %v69 = vmul.f32 %v40, %v65
  %v70 = vmul.f32 %v41, %v66
  %v71 = vmul.f32 %v42, %v67
  %v72 = vmul.f32 %v43, %v68
  %v73 = vpack.c.bf16 %v70, %v69
  %v74 = vpack.c.bf16 %v72, %v71
  %v75 = vld [vmem:[%s5] sm:$0xff]
  %v76 = vld [vmem:[%s5 + $0x8] sm:$0xff]
  %v77 = vld [vmem:[%s5 + $0x10] sm:$0xff]
  %v78 = vld [vmem:[%s5 + $0x18] sm:$0xff]
  %v79 = vpack.c.bf16 %v76, %v75
  %v80 = vpack.c.bf16 %v78, %v77
  %v81 = vld [vmem:[%s0] sm:$0xf]
  %v82 = vmul.f32 %v81, %v81
  %vm83 = vcmask 519168
  %v84 = vsel %vm83, %v82, 0.0
  %85 = vadd.xlane.f32.xlu0 %v84
  %v86 = vpop.xlane.xlu0 %85
  %v87 = vmax.f32 %v86, 1e-24
  %v88 = vrsqrt.pop %v87
  %v89 = vmul.f32 %v81, %v88
  %v90 = vpack.c.bf16 %v89, %v89
  %v92 = vsel %vm48, %v90, 0
  %v95 = vsel %vm48, %v73, 0
  %v98 = vsel %vm48, %v74, 0
  %100 = vmatprep.subr.bf16.mxu0 0
  %101 = vmatpush1.bf16.xpose.msra.mxu0 0
  %102 = vmatprep.subr.bf16.mxu0 0
  %103 = vmatpush1.bf16.xpose.msra.mxu0 0
  %104 = vmatprep.subr.bf16.mxu0 0
  %105 = vmatpush1.bf16.xpose.msra.mxu0 0
  %106 = vmatprep.subr.bf16.mxu0 0
  %107 = vmatpush1.bf16.xpose.msra.mxu0 0
  %108 = vmatprep.subr.bf16.mxu0 0
  %109 = vmatpush1.bf16.xpose.msra.mxu0 0
  %110 = vmatprep.subr.bf16.mxu0 0
  %111 = vmatpush1.bf16.xpose.msra.mxu0 0
  %112 = vmatprep.subr.bf16.mxu0 0
  %113 = vmatpush1.bf16.xpose.msra.mxu0 %v98
  %114 = vmatprep.subr.bf16.mxu0 0
  %115 = vmatpush1.bf16.xpose.msra.mxu0 %v95
  %116 = vmatprep.subr.bf16.mxu0 0
  %117 = vmatpush2.bf16.xpose.msra.mxu0 0
  %118 = vmatprep.subr.bf16.mxu0 0
  %119 = vmatpush2.bf16.xpose.msra.mxu0 0
  %120 = vmatprep.subr.bf16.mxu0 0
  %121 = vmatpush2.bf16.xpose.msra.mxu0 0
  %122 = vmatprep.subr.bf16.mxu0 0
  %123 = vmatpush2.bf16.xpose.msra.mxu0 0
  %124 = vmatprep.subr.bf16.mxu0 0
  %125 = vmatpush2.bf16.xpose.msra.mxu0 0
  %126 = vmatprep.subr.bf16.mxu0 0
  %127 = vmatpush2.bf16.xpose.msra.mxu0 0
  %128 = vmatprep.subr.bf16.mxu0 0
  %129 = vmatpush2.bf16.xpose.msra.mxu0 0
  %130 = vmatprep.subr.bf16.mxu0 0
  %131 = vmatpush2.bf16.xpose.msra.mxu0 0
  %132 = vmatprep.mubr.bf16.mxu0 0
  %133 = vmatmul.mubr.bf16.gmra.mxu0 %v92
  %v134 = vpop.f32.mrf.mxu0
  %v135 = vadd.f32 0.0, %v134
  %v136 = vpop.f32.mrf.mxu0
  %v137 = vpop.f32.mrf.mxu0
  %v138 = vpop.f32.mrf.mxu0
  %139 = vdwg.mxu0
  %vm140 = vcmask 257024
  %v141 = vsel %vm140, %v135, 0.0
  %142 = vadd.xlane.f32.xlu0 %v141
  %v143 = vpop.xlane.xlu0 %142
  %v144 = vrot.slane %v143, 4
  %v145 = vadd.f32 %v143, %v144
  %v146 = vrot.slane %v145, 2
  %v147 = vadd.f32 %v145, %v146
  %v148 = vrot.slane %v147, 1
  %v149 = vadd.f32 %v147, %v148
  %s150 = vtos %v149
  %s151 = smul.f32 %s150, 0.0078125
  %v152 = vmul.f32 %v135, %v135
  %v153 = vsel %vm140, %v152, 0.0
  %154 = vadd.xlane.f32.xlu0 %v153
  %v155 = vpop.xlane.xlu0 %154
  %v156 = vrot.slane %v155, 4
  %v157 = vadd.f32 %v155, %v156
  %v158 = vrot.slane %v157, 2
  %v159 = vadd.f32 %v157, %v158
  %v160 = vrot.slane %v159, 1
  %v161 = vadd.f32 %v159, %v160
  %s162 = vtos %v161
  %s163 = smul.f32 %s162, 0.0078125
  %s164 = smul.f32 %s151, 0.17677669
  %s165 = smul.f32 %s163, 0.03125
  %s166 = smul.f32 %s164, %s164
  %s167 = ssub.f32 %s165, %s166
  %s168 = sadd.f32 %s167, 1e-05
  %v169 = vstv %s168
  %v170 = vrsqrt.pop %v169
  %s171 = vtos %v170
  %s172 = smul.f32 %s171, 0.17677669
  %v173 = vstv %s172
  %v174 = vmul.f32 %v135, %v173
  %s175 = smul.f32 %s164, %s171
  %v176 = vstv %s175
  %v177 = vsub.f32 %v174, %v176
  %v178 = vsel %vm140, %v177, -inf
  %179 = vmax.xlane.f32.xlu0 %v178
  %v180 = vpop.xlane.xlu0 %179
  %v181 = vsub.f32 %v177, %v180
  %v182 = vmul.f32 %v181, 1.442695
  %v183 = vpow.pop %v182
  %v184 = vsel %vm140, %v183, 0.0
  %185 = vadd.xlane.f32.xlu0 %v184
  %v186 = vpop.xlane.xlu0 %185
  %v187 = vrcp.pop %v186
  %v188 = vmul.f32 %v183, %v187
  %v189 = vld [vmem:[%s6] sm:$0xf]
  %v190 = vpack.c.bf16 %v189, %v189
  %v191 = vpack.c.bf16 %v188, %v188
  %vm192 = vcmask 31744
  %v194 = vsel %vm192, %v190, 0
  %vm196 = vcmask 1041408
  %v198 = vsel %vm196, %v191, 0
  %200 = vmatprep.subr.bf16.mxu0 0
  %201 = vmatpush1.bf16.msra.mxu0 0
  %202 = vmatprep.subr.bf16.mxu0 0
  %203 = vmatpush1.bf16.msra.mxu0 0
  %204 = vmatprep.subr.bf16.mxu0 0
  %205 = vmatpush1.bf16.msra.mxu0 0
  %206 = vmatprep.subr.bf16.mxu0 0
  %207 = vmatpush1.bf16.msra.mxu0 0
  %208 = vmatprep.subr.bf16.mxu0 0
  %209 = vmatpush1.bf16.msra.mxu0 0
  %210 = vmatprep.subr.bf16.mxu0 0
  %211 = vmatpush1.bf16.msra.mxu0 0
  %212 = vmatprep.subr.bf16.mxu0 0
  %213 = vmatpush1.bf16.msra.mxu0 0
  %214 = vmatprep.subr.bf16.mxu0 0
  %215 = vmatpush1.bf16.msra.mxu0 %v198
  %216 = vmatprep.subr.bf16.mxu0 0
  %217 = vmatpush2.bf16.msra.mxu0 0
  %218 = vmatprep.subr.bf16.mxu0 0
  %219 = vmatpush2.bf16.msra.mxu0 0
  %220 = vmatprep.subr.bf16.mxu0 0
  %221 = vmatpush2.bf16.msra.mxu0 0
  %222 = vmatprep.subr.bf16.mxu0 0
  %223 = vmatpush2.bf16.msra.mxu0 0
  %224 = vmatprep.subr.bf16.mxu0 0
  %225 = vmatpush2.bf16.msra.mxu0 0
  %226 = vmatprep.subr.bf16.mxu0 0
  %227 = vmatpush2.bf16.msra.mxu0 0
  %228 = vmatprep.subr.bf16.mxu0 0
  %229 = vmatpush2.bf16.msra.mxu0 0
  %230 = vmatprep.subr.bf16.mxu0 0
  %231 = vmatpush2.bf16.msra.mxu0 0
  %232 = vmatprep.mubr.bf16.mxu0 0
  %233 = vmatmul.mubr.bf16.gmra.mxu0 %v194
  %v234 = vpop.f32.mrf.mxu0
  %v235 = vadd.f32 0.0, %v234
  %v236 = vpop.f32.mrf.mxu0
  %v237 = vpop.f32.mrf.mxu0
  %v238 = vpop.f32.mrf.mxu0
  %239 = vdwg.mxu0
  %v240 = vpack.c.bf16 %v235, %v235
  %vm241 = vcmask 261120
  %v243 = vsel %vm241, %v240, 0
  %245 = vmatprep.subr.bf16.mxu0 0
  %246 = vmatpush1.bf16.msra.mxu0 0
  %247 = vmatprep.subr.bf16.mxu0 0
  %248 = vmatpush1.bf16.msra.mxu0 0
  %249 = vmatprep.subr.bf16.mxu0 0
  %250 = vmatpush1.bf16.msra.mxu0 0
  %251 = vmatprep.subr.bf16.mxu0 0
  %252 = vmatpush1.bf16.msra.mxu0 0
  %253 = vmatprep.subr.bf16.mxu0 0
  %254 = vmatpush1.bf16.msra.mxu0 0
  %255 = vmatprep.subr.bf16.mxu0 0
  %256 = vmatpush1.bf16.msra.mxu0 0
  %257 = vmatprep.subr.bf16.mxu0 0
  %258 = vmatpush1.bf16.msra.mxu0 %v80
  %259 = vmatprep.subr.bf16.mxu0 0
  %260 = vmatpush1.bf16.msra.mxu0 %v79
  %261 = vmatprep.subr.bf16.mxu0 0
  %262 = vmatpush2.bf16.msra.mxu0 0
  %263 = vmatprep.subr.bf16.mxu0 0
  %264 = vmatpush2.bf16.msra.mxu0 0
  %265 = vmatprep.subr.bf16.mxu0 0
  %266 = vmatpush2.bf16.msra.mxu0 0
  %267 = vmatprep.subr.bf16.mxu0 0
  %268 = vmatpush2.bf16.msra.mxu0 0
  %269 = vmatprep.subr.bf16.mxu0 0
  %270 = vmatpush2.bf16.msra.mxu0 0
  %271 = vmatprep.subr.bf16.mxu0 0
  %272 = vmatpush2.bf16.msra.mxu0 0
  %273 = vmatprep.subr.bf16.mxu0 0
  %274 = vmatpush2.bf16.msra.mxu0 0
  %275 = vmatprep.subr.bf16.mxu0 0
  %276 = vmatpush2.bf16.msra.mxu0 0
  %277 = vmatprep.mubr.bf16.mxu0 0
  %278 = vmatmul.mubr.bf16.gmra.mxu0 %v243
  %v279 = vpop.f32.mrf.mxu0
  %v280 = vadd.f32 0.0, %v279
  %v281 = vpop.f32.mrf.mxu0
  %v282 = vpop.f32.mrf.mxu0
  %v283 = vpop.f32.mrf.mxu0
  %284 = vdwg.mxu0
  %285 = vst.msk [vmem:[%s10] sm:$0xf] %vm83, %v280
  %v286 = vld [vmem:[%s1] sm:$0xff]
  %v287 = vmul.f32 %v286, %v286
  %v288 = vsel %vm48, %v287, 0.0
  %289 = vadd.xlane.f32.xlu0 %v288
  %v290 = vpop.xlane.xlu0 %289
  %v291 = vmax.f32 %v290, 1e-24
  %v292 = vrsqrt.pop %v291
  %v293 = vmul.f32 %v286, %v292
  %v294 = vpack.c.bf16 %v293, %v293
  %v296 = vsel %vm48, %v294, 0
  %298 = vmatprep.subr.bf16.mxu0 0
  %299 = vmatpush1.bf16.xpose.msra.mxu0 0
  %300 = vmatprep.subr.bf16.mxu0 0
  %301 = vmatpush1.bf16.xpose.msra.mxu0 0
  %302 = vmatprep.subr.bf16.mxu0 0
  %303 = vmatpush1.bf16.xpose.msra.mxu0 0
  %304 = vmatprep.subr.bf16.mxu0 0
  %305 = vmatpush1.bf16.xpose.msra.mxu0 0
  %306 = vmatprep.subr.bf16.mxu0 0
  %307 = vmatpush1.bf16.xpose.msra.mxu0 0
  %308 = vmatprep.subr.bf16.mxu0 0
  %309 = vmatpush1.bf16.xpose.msra.mxu0 0
  %310 = vmatprep.subr.bf16.mxu0 0
  %311 = vmatpush1.bf16.xpose.msra.mxu0 %v98
  %312 = vmatprep.subr.bf16.mxu0 0
  %313 = vmatpush1.bf16.xpose.msra.mxu0 %v95
  %314 = vmatprep.subr.bf16.mxu0 0
  %315 = vmatpush2.bf16.xpose.msra.mxu0 0
  %316 = vmatprep.subr.bf16.mxu0 0
  %317 = vmatpush2.bf16.xpose.msra.mxu0 0
  %318 = vmatprep.subr.bf16.mxu0 0
  %319 = vmatpush2.bf16.xpose.msra.mxu0 0
  %320 = vmatprep.subr.bf16.mxu0 0
  %321 = vmatpush2.bf16.xpose.msra.mxu0 0
  %322 = vmatprep.subr.bf16.mxu0 0
  %323 = vmatpush2.bf16.xpose.msra.mxu0 0
  %324 = vmatprep.subr.bf16.mxu0 0
  %325 = vmatpush2.bf16.xpose.msra.mxu0 0
  %326 = vmatprep.subr.bf16.mxu0 0
  %327 = vmatpush2.bf16.xpose.msra.mxu0 0
  %328 = vmatprep.subr.bf16.mxu0 0
  %329 = vmatpush2.bf16.xpose.msra.mxu0 0
  %330 = vmatprep.mubr.bf16.mxu0 0
  %331 = vmatmul.mubr.bf16.gmra.mxu0 %v296
  %v332 = vpop.f32.mrf.mxu0
  %v333 = vadd.f32 0.0, %v332
  %v334 = vpop.f32.mrf.mxu0
  %v335 = vpop.f32.mrf.mxu0
  %v336 = vpop.f32.mrf.mxu0
  %337 = vdwg.mxu0
  %v338 = vsel %vm241, %v333, 0.0
  %339 = vadd.xlane.f32.xlu0 %v338
  %v340 = vpop.xlane.xlu0 %339
  %v341 = vrot.slane %v340, 4
  %v342 = vadd.f32 %v340, %v341
  %v343 = vrot.slane %v342, 2
  %v344 = vadd.f32 %v342, %v343
  %v345 = vrot.slane %v344, 1
  %v346 = vadd.f32 %v344, %v345
  %s347 = vtos %v346
  %s348 = smul.f32 %s347, 0.00390625
  %v349 = vmul.f32 %v333, %v333
  %v350 = vsel %vm241, %v349, 0.0
  %351 = vadd.xlane.f32.xlu0 %v350
  %v352 = vpop.xlane.xlu0 %351
  %v353 = vrot.slane %v352, 4
  %v354 = vadd.f32 %v352, %v353
  %v355 = vrot.slane %v354, 2
  %v356 = vadd.f32 %v354, %v355
  %v357 = vrot.slane %v356, 1
  %v358 = vadd.f32 %v356, %v357
  %s359 = vtos %v358
  %s360 = smul.f32 %s359, 0.00390625
  %s361 = smul.f32 %s348, 0.17677669
  %s362 = smul.f32 %s360, 0.03125
  %s363 = smul.f32 %s361, %s361
  %s364 = ssub.f32 %s362, %s363
  %s365 = sadd.f32 %s364, 1e-05
  %v366 = vstv %s365
  %v367 = vrsqrt.pop %v366
  %s368 = vtos %v367
  %s369 = smul.f32 %s368, 0.17677669
  %v370 = vstv %s369
  %v371 = vmul.f32 %v333, %v370
  %s372 = smul.f32 %s361, %s368
  %v373 = vstv %s372
  %v374 = vsub.f32 %v371, %v373
  %v375 = vsel %vm241, %v374, -inf
  %376 = vmax.xlane.f32.xlu0 %v375
  %v377 = vpop.xlane.xlu0 %376
  %v378 = vsub.f32 %v374, %v377
  %v379 = vmul.f32 %v378, 1.442695
  %v380 = vpow.pop %v379
  %v381 = vsel %vm241, %v380, 0.0
  %382 = vadd.xlane.f32.xlu0 %v381
  %v383 = vpop.xlane.xlu0 %382
  %v384 = vrcp.pop %v383
  %v385 = vmul.f32 %v380, %v384
  %v386 = vld [vmem:[%s7] sm:$0xff]
  %v387 = vpack.c.bf16 %v386, %v386
  %v388 = vpack.c.bf16 %v385, %v385
  %vm389 = vcmask 64512
  %v391 = vsel %vm389, %v387, 0
  %vm393 = vcmask 1043456
  %v395 = vsel %vm393, %v388, 0
  %397 = vmatprep.subr.bf16.mxu0 0
  %398 = vmatpush1.bf16.msra.mxu0 0
  %399 = vmatprep.subr.bf16.mxu0 0
  %400 = vmatpush1.bf16.msra.mxu0 0
  %401 = vmatprep.subr.bf16.mxu0 0
  %402 = vmatpush1.bf16.msra.mxu0 0
  %403 = vmatprep.subr.bf16.mxu0 0
  %404 = vmatpush1.bf16.msra.mxu0 0
  %405 = vmatprep.subr.bf16.mxu0 0
  %406 = vmatpush1.bf16.msra.mxu0 0
  %407 = vmatprep.subr.bf16.mxu0 0
  %408 = vmatpush1.bf16.msra.mxu0 0
  %409 = vmatprep.subr.bf16.mxu0 0
  %410 = vmatpush1.bf16.msra.mxu0 0
  %411 = vmatprep.subr.bf16.mxu0 0
  %412 = vmatpush1.bf16.msra.mxu0 %v395
  %413 = vmatprep.subr.bf16.mxu0 0
  %414 = vmatpush2.bf16.msra.mxu0 0
  %415 = vmatprep.subr.bf16.mxu0 0
  %416 = vmatpush2.bf16.msra.mxu0 0
  %417 = vmatprep.subr.bf16.mxu0 0
  %418 = vmatpush2.bf16.msra.mxu0 0
  %419 = vmatprep.subr.bf16.mxu0 0
  %420 = vmatpush2.bf16.msra.mxu0 0
  %421 = vmatprep.subr.bf16.mxu0 0
  %422 = vmatpush2.bf16.msra.mxu0 0
  %423 = vmatprep.subr.bf16.mxu0 0
  %424 = vmatpush2.bf16.msra.mxu0 0
  %425 = vmatprep.subr.bf16.mxu0 0
  %426 = vmatpush2.bf16.msra.mxu0 0
  %427 = vmatprep.subr.bf16.mxu0 0
  %428 = vmatpush2.bf16.msra.mxu0 0
  %429 = vmatprep.mubr.bf16.mxu0 0
  %430 = vmatmul.mubr.bf16.gmra.mxu0 %v391
  %v431 = vpop.f32.mrf.mxu0
  %v432 = vadd.f32 0.0, %v431
  %v433 = vpop.f32.mrf.mxu0
  %v434 = vpop.f32.mrf.mxu0
  %v435 = vpop.f32.mrf.mxu0
  %436 = vdwg.mxu0
  %v437 = vpack.c.bf16 %v432, %v432
  %v439 = vsel %vm241, %v437, 0
  %441 = vmatprep.subr.bf16.mxu0 0
  %442 = vmatpush1.bf16.msra.mxu0 0
  %443 = vmatprep.subr.bf16.mxu0 0
  %444 = vmatpush1.bf16.msra.mxu0 0
  %445 = vmatprep.subr.bf16.mxu0 0
  %446 = vmatpush1.bf16.msra.mxu0 0
  %447 = vmatprep.subr.bf16.mxu0 0
  %448 = vmatpush1.bf16.msra.mxu0 0
  %449 = vmatprep.subr.bf16.mxu0 0
  %450 = vmatpush1.bf16.msra.mxu0 0
  %451 = vmatprep.subr.bf16.mxu0 0
  %452 = vmatpush1.bf16.msra.mxu0 0
  %453 = vmatprep.subr.bf16.mxu0 0
  %454 = vmatpush1.bf16.msra.mxu0 %v80
  %455 = vmatprep.subr.bf16.mxu0 0
  %456 = vmatpush1.bf16.msra.mxu0 %v79
  %457 = vmatprep.subr.bf16.mxu0 0
  %458 = vmatpush2.bf16.msra.mxu0 0
  %459 = vmatprep.subr.bf16.mxu0 0
  %460 = vmatpush2.bf16.msra.mxu0 0
  %461 = vmatprep.subr.bf16.mxu0 0
  %462 = vmatpush2.bf16.msra.mxu0 0
  %463 = vmatprep.subr.bf16.mxu0 0
  %464 = vmatpush2.bf16.msra.mxu0 0
  %465 = vmatprep.subr.bf16.mxu0 0
  %466 = vmatpush2.bf16.msra.mxu0 0
  %467 = vmatprep.subr.bf16.mxu0 0
  %468 = vmatpush2.bf16.msra.mxu0 0
  %469 = vmatprep.subr.bf16.mxu0 0
  %470 = vmatpush2.bf16.msra.mxu0 0
  %471 = vmatprep.subr.bf16.mxu0 0
  %472 = vmatpush2.bf16.msra.mxu0 0
  %473 = vmatprep.mubr.bf16.mxu0 0
  %474 = vmatmul.mubr.bf16.gmra.mxu0 %v439
  %v475 = vpop.f32.mrf.mxu0
  %v476 = vadd.f32 0.0, %v475
  %v477 = vpop.f32.mrf.mxu0
  %v478 = vpop.f32.mrf.mxu0
  %v479 = vpop.f32.mrf.mxu0
  %480 = vdwg.mxu0
  %481 = vst.msk [vmem:[%s11] sm:$0xff] %vm48, %v476
  %v482 = vld [vmem:[%s2] sm:$0xff]
  %v483 = vmul.f32 %v482, %v482
  %v484 = vsel %vm48, %v483, 0.0
  %485 = vadd.xlane.f32.xlu0 %v484
  %v486 = vpop.xlane.xlu0 %485
  %v487 = vmax.f32 %v486, 1e-24
  %v488 = vrsqrt.pop %v487
  %v489 = vmul.f32 %v482, %v488
  %v490 = vpack.c.bf16 %v489, %v489
  %v492 = vsel %vm48, %v490, 0
  %494 = vmatprep.subr.bf16.mxu0 0
  %495 = vmatpush1.bf16.xpose.msra.mxu0 0
  %496 = vmatprep.subr.bf16.mxu0 0
  %497 = vmatpush1.bf16.xpose.msra.mxu0 0
  %498 = vmatprep.subr.bf16.mxu0 0
  %499 = vmatpush1.bf16.xpose.msra.mxu0 0
  %500 = vmatprep.subr.bf16.mxu0 0
  %501 = vmatpush1.bf16.xpose.msra.mxu0 0
  %502 = vmatprep.subr.bf16.mxu0 0
  %503 = vmatpush1.bf16.xpose.msra.mxu0 0
  %504 = vmatprep.subr.bf16.mxu0 0
  %505 = vmatpush1.bf16.xpose.msra.mxu0 0
  %506 = vmatprep.subr.bf16.mxu0 0
  %507 = vmatpush1.bf16.xpose.msra.mxu0 %v98
  %508 = vmatprep.subr.bf16.mxu0 0
  %509 = vmatpush1.bf16.xpose.msra.mxu0 %v95
  %510 = vmatprep.subr.bf16.mxu0 0
  %511 = vmatpush2.bf16.xpose.msra.mxu0 0
  %512 = vmatprep.subr.bf16.mxu0 0
  %513 = vmatpush2.bf16.xpose.msra.mxu0 0
  %514 = vmatprep.subr.bf16.mxu0 0
  %515 = vmatpush2.bf16.xpose.msra.mxu0 0
  %516 = vmatprep.subr.bf16.mxu0 0
  %517 = vmatpush2.bf16.xpose.msra.mxu0 0
  %518 = vmatprep.subr.bf16.mxu0 0
  %519 = vmatpush2.bf16.xpose.msra.mxu0 0
  %520 = vmatprep.subr.bf16.mxu0 0
  %521 = vmatpush2.bf16.xpose.msra.mxu0 0
  %522 = vmatprep.subr.bf16.mxu0 0
  %523 = vmatpush2.bf16.xpose.msra.mxu0 0
  %524 = vmatprep.subr.bf16.mxu0 0
  %525 = vmatpush2.bf16.xpose.msra.mxu0 0
  %526 = vmatprep.mubr.bf16.mxu0 0
  %527 = vmatmul.mubr.bf16.gmra.mxu0 %v492
  %v528 = vpop.f32.mrf.mxu0
  %v529 = vadd.f32 0.0, %v528
  %v530 = vpop.f32.mrf.mxu0
  %v531 = vpop.f32.mrf.mxu0
  %v532 = vpop.f32.mrf.mxu0
  %533 = vdwg.mxu0
  %v534 = vsel %vm241, %v529, 0.0
  %535 = vadd.xlane.f32.xlu0 %v534
  %v536 = vpop.xlane.xlu0 %535
  %v537 = vrot.slane %v536, 4
  %v538 = vadd.f32 %v536, %v537
  %v539 = vrot.slane %v538, 2
  %v540 = vadd.f32 %v538, %v539
  %v541 = vrot.slane %v540, 1
  %v542 = vadd.f32 %v540, %v541
  %s543 = vtos %v542
  %s544 = smul.f32 %s543, 0.00390625
  %v545 = vmul.f32 %v529, %v529
  %v546 = vsel %vm241, %v545, 0.0
  %547 = vadd.xlane.f32.xlu0 %v546
  %v548 = vpop.xlane.xlu0 %547
  %v549 = vrot.slane %v548, 4
  %v550 = vadd.f32 %v548, %v549
  %v551 = vrot.slane %v550, 2
  %v552 = vadd.f32 %v550, %v551
  %v553 = vrot.slane %v552, 1
  %v554 = vadd.f32 %v552, %v553
  %s555 = vtos %v554
  %s556 = smul.f32 %s555, 0.00390625
  %s557 = smul.f32 %s544, 0.17677669
  %s558 = smul.f32 %s556, 0.03125
  %s559 = smul.f32 %s557, %s557
  %s560 = ssub.f32 %s558, %s559
  %s561 = sadd.f32 %s560, 1e-05
  %v562 = vstv %s561
  %v563 = vrsqrt.pop %v562
  %s564 = vtos %v563
  %s565 = smul.f32 %s564, 0.17677669
  %v566 = vstv %s565
  %v567 = vmul.f32 %v529, %v566
  %s568 = smul.f32 %s557, %s564
  %v569 = vstv %s568
  %v570 = vsub.f32 %v567, %v569
  %v571 = vsel %vm241, %v570, -inf
  %572 = vmax.xlane.f32.xlu0 %v571
  %v573 = vpop.xlane.xlu0 %572
  %v574 = vsub.f32 %v570, %v573
  %v575 = vmul.f32 %v574, 1.442695
  %v576 = vpow.pop %v575
  %v577 = vsel %vm241, %v576, 0.0
  %578 = vadd.xlane.f32.xlu0 %v577
  %v579 = vpop.xlane.xlu0 %578
  %v580 = vrcp.pop %v579
  %v581 = vmul.f32 %v576, %v580
  %v582 = vld [vmem:[%s8] sm:$0xff]
  %v583 = vpack.c.bf16 %v582, %v582
  %v584 = vpack.c.bf16 %v581, %v581
  %v586 = vsel %vm389, %v583, 0
  %v589 = vsel %vm393, %v584, 0
  %591 = vmatprep.subr.bf16.mxu0 0
  %592 = vmatpush1.bf16.msra.mxu0 0
  %593 = vmatprep.subr.bf16.mxu0 0
  %594 = vmatpush1.bf16.msra.mxu0 0
  %595 = vmatprep.subr.bf16.mxu0 0
  %596 = vmatpush1.bf16.msra.mxu0 0
  %597 = vmatprep.subr.bf16.mxu0 0
  %598 = vmatpush1.bf16.msra.mxu0 0
  %599 = vmatprep.subr.bf16.mxu0 0
  %600 = vmatpush1.bf16.msra.mxu0 0
  %601 = vmatprep.subr.bf16.mxu0 0
  %602 = vmatpush1.bf16.msra.mxu0 0
  %603 = vmatprep.subr.bf16.mxu0 0
  %604 = vmatpush1.bf16.msra.mxu0 0
  %605 = vmatprep.subr.bf16.mxu0 0
  %606 = vmatpush1.bf16.msra.mxu0 %v589
  %607 = vmatprep.subr.bf16.mxu0 0
  %608 = vmatpush2.bf16.msra.mxu0 0
  %609 = vmatprep.subr.bf16.mxu0 0
  %610 = vmatpush2.bf16.msra.mxu0 0
  %611 = vmatprep.subr.bf16.mxu0 0
  %612 = vmatpush2.bf16.msra.mxu0 0
  %613 = vmatprep.subr.bf16.mxu0 0
  %614 = vmatpush2.bf16.msra.mxu0 0
  %615 = vmatprep.subr.bf16.mxu0 0
  %616 = vmatpush2.bf16.msra.mxu0 0
  %617 = vmatprep.subr.bf16.mxu0 0
  %618 = vmatpush2.bf16.msra.mxu0 0
  %619 = vmatprep.subr.bf16.mxu0 0
  %620 = vmatpush2.bf16.msra.mxu0 0
  %621 = vmatprep.subr.bf16.mxu0 0
  %622 = vmatpush2.bf16.msra.mxu0 0
  %623 = vmatprep.mubr.bf16.mxu0 0
  %624 = vmatmul.mubr.bf16.gmra.mxu0 %v586
  %v625 = vpop.f32.mrf.mxu0
  %v626 = vadd.f32 0.0, %v625
  %v627 = vpop.f32.mrf.mxu0
  %v628 = vpop.f32.mrf.mxu0
  %v629 = vpop.f32.mrf.mxu0
  %630 = vdwg.mxu0
  %v631 = vpack.c.bf16 %v626, %v626
  %v633 = vsel %vm241, %v631, 0
  %635 = vmatprep.subr.bf16.mxu0 0
  %636 = vmatpush1.bf16.msra.mxu0 0
  %637 = vmatprep.subr.bf16.mxu0 0
  %638 = vmatpush1.bf16.msra.mxu0 0
  %639 = vmatprep.subr.bf16.mxu0 0
  %640 = vmatpush1.bf16.msra.mxu0 0
  %641 = vmatprep.subr.bf16.mxu0 0
  %642 = vmatpush1.bf16.msra.mxu0 0
  %643 = vmatprep.subr.bf16.mxu0 0
  %644 = vmatpush1.bf16.msra.mxu0 0
  %645 = vmatprep.subr.bf16.mxu0 0
  %646 = vmatpush1.bf16.msra.mxu0 0
  %647 = vmatprep.subr.bf16.mxu0 0
  %648 = vmatpush1.bf16.msra.mxu0 %v80
  %649 = vmatprep.subr.bf16.mxu0 0
  %650 = vmatpush1.bf16.msra.mxu0 %v79
  %651 = vmatprep.subr.bf16.mxu0 0
  %652 = vmatpush2.bf16.msra.mxu0 0
  %653 = vmatprep.subr.bf16.mxu0 0
  %654 = vmatpush2.bf16.msra.mxu0 0
  %655 = vmatprep.subr.bf16.mxu0 0
  %656 = vmatpush2.bf16.msra.mxu0 0
  %657 = vmatprep.subr.bf16.mxu0 0
  %658 = vmatpush2.bf16.msra.mxu0 0
  %659 = vmatprep.subr.bf16.mxu0 0
  %660 = vmatpush2.bf16.msra.mxu0 0
  %661 = vmatprep.subr.bf16.mxu0 0
  %662 = vmatpush2.bf16.msra.mxu0 0
  %663 = vmatprep.subr.bf16.mxu0 0
  %664 = vmatpush2.bf16.msra.mxu0 0
  %665 = vmatprep.subr.bf16.mxu0 0
  %666 = vmatpush2.bf16.msra.mxu0 0
  %667 = vmatprep.mubr.bf16.mxu0 0
  %668 = vmatmul.mubr.bf16.gmra.mxu0 %v633
  %v669 = vpop.f32.mrf.mxu0
  %v670 = vadd.f32 0.0, %v669
  %v671 = vpop.f32.mrf.mxu0
  %v672 = vpop.f32.mrf.mxu0
  %v673 = vpop.f32.mrf.mxu0
  %674 = vdwg.mxu0
  %675 = vst.msk [vmem:[%s12] sm:$0xff] %vm48, %v670
  %v676 = vld [vmem:[%s3] sm:$0xff]
  %v677 = vld [vmem:[%s3 + $0x8] sm:$0xf]
  %v678 = vmul.f32 %v676, %v676
  %v679 = vmul.f32 %v677, %v677
  %v680 = vsel %vm48, %v678, 0.0
  %681 = vadd.xlane.f32.xlu0 %v680
  %v682 = vpop.xlane.xlu0 %681
  %v683 = vsel %vm83, %v679, 0.0
  %684 = vadd.xlane.f32.xlu0 %v683
  %v685 = vpop.xlane.xlu0 %684
  %v686 = vmax.f32 %v682, 1e-24
  %v687 = vmax.f32 %v685, 1e-24
  %v688 = vrsqrt.pop %v686
  %v689 = vrsqrt.pop %v687
  %v690 = vmul.f32 %v676, %v688
  %v691 = vmul.f32 %v677, %v689
  %v692 = vpack.c.bf16 %v691, %v690
  %v694 = vsel %vm48, %v692, 0
  %696 = vmatprep.subr.bf16.mxu0 0
  %697 = vmatpush1.bf16.xpose.msra.mxu0 0
  %698 = vmatprep.subr.bf16.mxu0 0
  %699 = vmatpush1.bf16.xpose.msra.mxu0 0
  %700 = vmatprep.subr.bf16.mxu0 0
  %701 = vmatpush1.bf16.xpose.msra.mxu0 0
  %702 = vmatprep.subr.bf16.mxu0 0
  %703 = vmatpush1.bf16.xpose.msra.mxu0 0
  %704 = vmatprep.subr.bf16.mxu0 0
  %705 = vmatpush1.bf16.xpose.msra.mxu0 0
  %706 = vmatprep.subr.bf16.mxu0 0
  %707 = vmatpush1.bf16.xpose.msra.mxu0 0
  %708 = vmatprep.subr.bf16.mxu0 0
  %709 = vmatpush1.bf16.xpose.msra.mxu0 %v98
  %710 = vmatprep.subr.bf16.mxu0 0
  %711 = vmatpush1.bf16.xpose.msra.mxu0 %v95
  %712 = vmatprep.subr.bf16.mxu0 0
  %713 = vmatpush2.bf16.xpose.msra.mxu0 0
  %714 = vmatprep.subr.bf16.mxu0 0
  %715 = vmatpush2.bf16.xpose.msra.mxu0 0
  %716 = vmatprep.subr.bf16.mxu0 0
  %717 = vmatpush2.bf16.xpose.msra.mxu0 0
  %718 = vmatprep.subr.bf16.mxu0 0
  %719 = vmatpush2.bf16.xpose.msra.mxu0 0
  %720 = vmatprep.subr.bf16.mxu0 0
  %721 = vmatpush2.bf16.xpose.msra.mxu0 0
  %722 = vmatprep.subr.bf16.mxu0 0
  %723 = vmatpush2.bf16.xpose.msra.mxu0 0
  %724 = vmatprep.subr.bf16.mxu0 0
  %725 = vmatpush2.bf16.xpose.msra.mxu0 0
  %726 = vmatprep.subr.bf16.mxu0 0
  %727 = vmatpush2.bf16.xpose.msra.mxu0 0
  %728 = vmatprep.mubr.bf16.mxu0 0
  %729 = vmatmul.mubr.bf16.gmra.mxu0 %v694
  %v730 = vpop.f32.mrf.mxu0
  %v731 = vadd.f32 0.0, %v730
  %v732 = vpop.f32.mrf.mxu0
  %v733 = vpop.f32.mrf.mxu0
  %v734 = vadd.f32 0.0, %v733
  %v735 = vpop.f32.mrf.mxu0
  %736 = vdwg.mxu0
  %v737 = vsel %vm241, %v731, 0.0
  %v738 = vsel %vm140, %v734, 0.0
  %v739 = vadd.f32 %v737, %v738
  %740 = vadd.xlane.f32.xlu0 %v739
  %v741 = vpop.xlane.xlu0 %740
  %v742 = vrot.slane %v741, 4
  %v743 = vadd.f32 %v741, %v742
  %v744 = vrot.slane %v743, 2
  %v745 = vadd.f32 %v743, %v744
  %v746 = vrot.slane %v745, 1
  %v747 = vadd.f32 %v745, %v746
  %s748 = vtos %v747
  %s749 = smul.f32 %s748, 0.0026041667
  %v750 = vmul.f32 %v731, %v731
  %v751 = vmul.f32 %v734, %v734
  %v752 = vsel %vm241, %v750, 0.0
  %v753 = vsel %vm140, %v751, 0.0
  %v754 = vadd.f32 %v752, %v753
  %755 = vadd.xlane.f32.xlu0 %v754
  %v756 = vpop.xlane.xlu0 %755
  %v757 = vrot.slane %v756, 4
  %v758 = vadd.f32 %v756, %v757
  %v759 = vrot.slane %v758, 2
  %v760 = vadd.f32 %v758, %v759
  %v761 = vrot.slane %v760, 1
  %v762 = vadd.f32 %v760, %v761
  %s763 = vtos %v762
  %s764 = smul.f32 %s763, 0.0026041667
  %s765 = smul.f32 %s749, 0.17677669
  %s766 = smul.f32 %s764, 0.03125
  %s767 = smul.f32 %s765, %s765
  %s768 = ssub.f32 %s766, %s767
  %s769 = sadd.f32 %s768, 1e-05
  %v770 = vstv %s769
  %v771 = vrsqrt.pop %v770
  %s772 = vtos %v771
  %s773 = smul.f32 %s772, 0.17677669
  %v774 = vstv %s773
  %v775 = vmul.f32 %v731, %v774
  %v776 = vmul.f32 %v734, %v774
  %s777 = smul.f32 %s765, %s772
  %v778 = vstv %s777
  %v779 = vsub.f32 %v775, %v778
  %v780 = vsub.f32 %v776, %v778
  %v781 = vsel %vm241, %v779, -inf
  %782 = vmax.xlane.f32.xlu0 %v781
  %v783 = vpop.xlane.xlu0 %782
  %v784 = vsel %vm140, %v780, -inf
  %785 = vmax.xlane.f32.xlu0 %v784
  %v786 = vpop.xlane.xlu0 %785
  %v787 = vsub.f32 %v779, %v783
  %v788 = vsub.f32 %v780, %v786
  %v789 = vmul.f32 %v787, 1.442695
  %v790 = vpow.pop %v789
  %v791 = vmul.f32 %v788, 1.442695
  %v792 = vpow.pop %v791
  %v793 = vsel %vm241, %v790, 0.0
  %794 = vadd.xlane.f32.xlu0 %v793
  %v795 = vpop.xlane.xlu0 %794
  %v796 = vsel %vm140, %v792, 0.0
  %797 = vadd.xlane.f32.xlu0 %v796
  %v798 = vpop.xlane.xlu0 %797
  %v799 = vrcp.pop %v795
  %v800 = vrcp.pop %v798
  %v801 = vmul.f32 %v790, %v799
  %v802 = vmul.f32 %v792, %v800
  %v803 = vld [vmem:[%s9] sm:$0xff]
  %v804 = vld [vmem:[%s9 + $0x8] sm:$0xf]
  %v805 = vpack.c.bf16 %v804, %v803
  %v806 = vpack.c.bf16 %v802, %v801
  %vm807 = vcmask 97280
  %v809 = vsel %vm807, %v805, 0
  %vm811 = vcmask 1045504
  %v813 = vsel %vm811, %v806, 0
  %815 = vmatprep.subr.bf16.mxu0 0
  %816 = vmatpush1.bf16.msra.mxu0 0
  %817 = vmatprep.subr.bf16.mxu0 0
  %818 = vmatpush1.bf16.msra.mxu0 0
  %819 = vmatprep.subr.bf16.mxu0 0
  %820 = vmatpush1.bf16.msra.mxu0 0
  %821 = vmatprep.subr.bf16.mxu0 0
  %822 = vmatpush1.bf16.msra.mxu0 0
  %823 = vmatprep.subr.bf16.mxu0 0
  %824 = vmatpush1.bf16.msra.mxu0 0
  %825 = vmatprep.subr.bf16.mxu0 0
  %826 = vmatpush1.bf16.msra.mxu0 0
  %827 = vmatprep.subr.bf16.mxu0 0
  %828 = vmatpush1.bf16.msra.mxu0 0
  %829 = vmatprep.subr.bf16.mxu0 0
  %830 = vmatpush1.bf16.msra.mxu0 %v813
  %831 = vmatprep.subr.bf16.mxu0 0
  %832 = vmatpush2.bf16.msra.mxu0 0
  %833 = vmatprep.subr.bf16.mxu0 0
  %834 = vmatpush2.bf16.msra.mxu0 0
  %835 = vmatprep.subr.bf16.mxu0 0
  %836 = vmatpush2.bf16.msra.mxu0 0
  %837 = vmatprep.subr.bf16.mxu0 0
  %838 = vmatpush2.bf16.msra.mxu0 0
  %839 = vmatprep.subr.bf16.mxu0 0
  %840 = vmatpush2.bf16.msra.mxu0 0
  %841 = vmatprep.subr.bf16.mxu0 0
  %842 = vmatpush2.bf16.msra.mxu0 0
  %843 = vmatprep.subr.bf16.mxu0 0
  %844 = vmatpush2.bf16.msra.mxu0 0
  %845 = vmatprep.subr.bf16.mxu0 0
  %846 = vmatpush2.bf16.msra.mxu0 0
  %847 = vmatprep.mubr.bf16.mxu0 0
  %848 = vmatmul.mubr.bf16.gmra.mxu0 %v809
  %v849 = vpop.f32.mrf.mxu0
  %v850 = vadd.f32 0.0, %v849
  %v851 = vpop.f32.mrf.mxu0
  %v852 = vpop.f32.mrf.mxu0
  %v853 = vadd.f32 0.0, %v852
  %v854 = vpop.f32.mrf.mxu0
  %855 = vdwg.mxu0
  %v856 = vpack.c.bf16 %v853, %v850
  %v858 = vsel %vm241, %v856, 0
  %860 = vmatprep.subr.bf16.mxu0 0
  %861 = vmatpush1.bf16.msra.mxu0 0
  %862 = vmatprep.subr.bf16.mxu0 0
  %863 = vmatpush1.bf16.msra.mxu0 0
  %864 = vmatprep.subr.bf16.mxu0 0
  %865 = vmatpush1.bf16.msra.mxu0 0
  %866 = vmatprep.subr.bf16.mxu0 0
  %867 = vmatpush1.bf16.msra.mxu0 0
  %868 = vmatprep.subr.bf16.mxu0 0
  %869 = vmatpush1.bf16.msra.mxu0 0
  %870 = vmatprep.subr.bf16.mxu0 0
  %871 = vmatpush1.bf16.msra.mxu0 0
  %872 = vmatprep.subr.bf16.mxu0 0
  %873 = vmatpush1.bf16.msra.mxu0 %v80
  %874 = vmatprep.subr.bf16.mxu0 0
  %875 = vmatpush1.bf16.msra.mxu0 %v79
  %876 = vmatprep.subr.bf16.mxu0 0
  %877 = vmatpush2.bf16.msra.mxu0 0
  %878 = vmatprep.subr.bf16.mxu0 0
  %879 = vmatpush2.bf16.msra.mxu0 0
  %880 = vmatprep.subr.bf16.mxu0 0
  %881 = vmatpush2.bf16.msra.mxu0 0
  %882 = vmatprep.subr.bf16.mxu0 0
  %883 = vmatpush2.bf16.msra.mxu0 0
  %884 = vmatprep.subr.bf16.mxu0 0
  %885 = vmatpush2.bf16.msra.mxu0 0
  %886 = vmatprep.subr.bf16.mxu0 0
  %887 = vmatpush2.bf16.msra.mxu0 0
  %888 = vmatprep.subr.bf16.mxu0 0
  %889 = vmatpush2.bf16.msra.mxu0 0
  %890 = vmatprep.subr.bf16.mxu0 0
  %891 = vmatpush2.bf16.msra.mxu0 0
  %892 = vmatprep.mubr.bf16.mxu0 0
  %893 = vmatmul.mubr.bf16.gmra.mxu0 %v858
  %v894 = vpop.f32.mrf.mxu0
  %v895 = vadd.f32 0.0, %v894
  %v896 = vpop.f32.mrf.mxu0
  %v897 = vpop.f32.mrf.mxu0
  %v898 = vadd.f32 0.0, %v897
  %v899 = vpop.f32.mrf.mxu0
  %900 = vdwg.mxu0
  %901 = vst.msk [vmem:[%s13] sm:$0xff] %vm48, %v895
  %902 = vst.msk [vmem:[%s13 + $0x8] sm:$0xf] %vm83, %v898
  %s903 = scalar_lea.vmem %s4, 32
  %v904 = vld [vmem:[%s903] sm:$0xff]
  %v905 = vld [vmem:[%s903 + $0x8] sm:$0xff]
  %v906 = vld [vmem:[%s903 + $0x10] sm:$0xff]
  %v907 = vld [vmem:[%s903 + $0x18] sm:$0xff]
  %v908 = vmul.f32 %v904, %v904
  %v909 = vmul.f32 %v905, %v905
  %v910 = vmul.f32 %v906, %v906
  %v911 = vmul.f32 %v907, %v907
  %v912 = vsel %vm48, %v908, 0.0
  %913 = vadd.xlane.f32.xlu0 %v912
  %v914 = vpop.xlane.xlu0 %913
  %v915 = vsel %vm48, %v909, 0.0
  %916 = vadd.xlane.f32.xlu0 %v915
  %v917 = vpop.xlane.xlu0 %916
  %v918 = vsel %vm48, %v910, 0.0
  %919 = vadd.xlane.f32.xlu0 %v918
  %v920 = vpop.xlane.xlu0 %919
  %v921 = vsel %vm48, %v911, 0.0
  %922 = vadd.xlane.f32.xlu0 %v921
  %v923 = vpop.xlane.xlu0 %922
  %v924 = vmax.f32 %v914, 1e-24
  %v925 = vmax.f32 %v917, 1e-24
  %v926 = vmax.f32 %v920, 1e-24
  %v927 = vmax.f32 %v923, 1e-24
  %v928 = vrsqrt.pop %v924
  %v929 = vrsqrt.pop %v925
  %v930 = vrsqrt.pop %v926
  %v931 = vrsqrt.pop %v927
  %v932 = vmul.f32 %v904, %v928
  %v933 = vmul.f32 %v905, %v929
  %v934 = vmul.f32 %v906, %v930
  %v935 = vmul.f32 %v907, %v931
  %v936 = vpack.c.bf16 %v933, %v932
  %v937 = vpack.c.bf16 %v935, %v934
  %s938 = scalar_lea.vmem %s5, 32
  %v939 = vld [vmem:[%s938] sm:$0xff]
  %v940 = vld [vmem:[%s938 + $0x8] sm:$0xff]
  %v941 = vld [vmem:[%s938 + $0x10] sm:$0xff]
  %v942 = vld [vmem:[%s938 + $0x18] sm:$0xff]
  %v943 = vpack.c.bf16 %v940, %v939
  %v944 = vpack.c.bf16 %v942, %v941
  %s945 = scalar_lea.vmem %s0, 4
  %v946 = vld [vmem:[%s945] sm:$0xf]
  %v947 = vmul.f32 %v946, %v946
  %v948 = vsel %vm83, %v947, 0.0
  %949 = vadd.xlane.f32.xlu0 %v948
  %v950 = vpop.xlane.xlu0 %949
  %v951 = vmax.f32 %v950, 1e-24
  %v952 = vrsqrt.pop %v951
  %v953 = vmul.f32 %v946, %v952
  %v954 = vpack.c.bf16 %v953, %v953
  %v956 = vsel %vm48, %v954, 0
  %v959 = vsel %vm48, %v936, 0
  %v962 = vsel %vm48, %v937, 0
  %964 = vmatprep.subr.bf16.mxu0 0
  %965 = vmatpush1.bf16.xpose.msra.mxu0 0
  %966 = vmatprep.subr.bf16.mxu0 0
  %967 = vmatpush1.bf16.xpose.msra.mxu0 0
  %968 = vmatprep.subr.bf16.mxu0 0
  %969 = vmatpush1.bf16.xpose.msra.mxu0 0
  %970 = vmatprep.subr.bf16.mxu0 0
  %971 = vmatpush1.bf16.xpose.msra.mxu0 0
  %972 = vmatprep.subr.bf16.mxu0 0
  %973 = vmatpush1.bf16.xpose.msra.mxu0 0
  %974 = vmatprep.subr.bf16.mxu0 0
  %975 = vmatpush1.bf16.xpose.msra.mxu0 0
  %976 = vmatprep.subr.bf16.mxu0 0
  %977 = vmatpush1.bf16.xpose.msra.mxu0 %v962
  %978 = vmatprep.subr.bf16.mxu0 0
  %979 = vmatpush1.bf16.xpose.msra.mxu0 %v959
  %980 = vmatprep.subr.bf16.mxu0 0
  %981 = vmatpush2.bf16.xpose.msra.mxu0 0
  %982 = vmatprep.subr.bf16.mxu0 0
  %983 = vmatpush2.bf16.xpose.msra.mxu0 0
  %984 = vmatprep.subr.bf16.mxu0 0
  %985 = vmatpush2.bf16.xpose.msra.mxu0 0
  %986 = vmatprep.subr.bf16.mxu0 0
  %987 = vmatpush2.bf16.xpose.msra.mxu0 0
  %988 = vmatprep.subr.bf16.mxu0 0
  %989 = vmatpush2.bf16.xpose.msra.mxu0 0
  %990 = vmatprep.subr.bf16.mxu0 0
  %991 = vmatpush2.bf16.xpose.msra.mxu0 0
  %992 = vmatprep.subr.bf16.mxu0 0
  %993 = vmatpush2.bf16.xpose.msra.mxu0 0
  %994 = vmatprep.subr.bf16.mxu0 0
  %995 = vmatpush2.bf16.xpose.msra.mxu0 0
  %996 = vmatprep.mubr.bf16.mxu0 0
  %997 = vmatmul.mubr.bf16.gmra.mxu0 %v956
  %v998 = vpop.f32.mrf.mxu0
  %v999 = vadd.f32 0.0, %v998
  %v1000 = vpop.f32.mrf.mxu0
  %v1001 = vpop.f32.mrf.mxu0
  %v1002 = vpop.f32.mrf.mxu0
  %1003 = vdwg.mxu0
  %v1004 = vsel %vm140, %v999, 0.0
  %1005 = vadd.xlane.f32.xlu0 %v1004
  %v1006 = vpop.xlane.xlu0 %1005
  %v1007 = vrot.slane %v1006, 4
  %v1008 = vadd.f32 %v1006, %v1007
  %v1009 = vrot.slane %v1008, 2
  %v1010 = vadd.f32 %v1008, %v1009
  %v1011 = vrot.slane %v1010, 1
  %v1012 = vadd.f32 %v1010, %v1011
  %s1013 = vtos %v1012
  %s1014 = smul.f32 %s1013, 0.0078125
  %v1015 = vmul.f32 %v999, %v999
  %v1016 = vsel %vm140, %v1015, 0.0
  %1017 = vadd.xlane.f32.xlu0 %v1016
  %v1018 = vpop.xlane.xlu0 %1017
  %v1019 = vrot.slane %v1018, 4
  %v1020 = vadd.f32 %v1018, %v1019
  %v1021 = vrot.slane %v1020, 2
  %v1022 = vadd.f32 %v1020, %v1021
  %v1023 = vrot.slane %v1022, 1
  %v1024 = vadd.f32 %v1022, %v1023
  %s1025 = vtos %v1024
  %s1026 = smul.f32 %s1025, 0.0078125
  %s1027 = smul.f32 %s1014, 0.17677669
  %s1028 = smul.f32 %s1026, 0.03125
  %s1029 = smul.f32 %s1027, %s1027
  %s1030 = ssub.f32 %s1028, %s1029
  %s1031 = sadd.f32 %s1030, 1e-05
  %v1032 = vstv %s1031
  %v1033 = vrsqrt.pop %v1032
  %s1034 = vtos %v1033
  %s1035 = smul.f32 %s1034, 0.17677669
  %v1036 = vstv %s1035
  %v1037 = vmul.f32 %v999, %v1036
  %s1038 = smul.f32 %s1027, %s1034
  %v1039 = vstv %s1038
  %v1040 = vsub.f32 %v1037, %v1039
  %v1041 = vsel %vm140, %v1040, -inf
  %1042 = vmax.xlane.f32.xlu0 %v1041
  %v1043 = vpop.xlane.xlu0 %1042
  %v1044 = vsub.f32 %v1040, %v1043
  %v1045 = vmul.f32 %v1044, 1.442695
  %v1046 = vpow.pop %v1045
  %v1047 = vsel %vm140, %v1046, 0.0
  %1048 = vadd.xlane.f32.xlu0 %v1047
  %v1049 = vpop.xlane.xlu0 %1048
  %v1050 = vrcp.pop %v1049
  %v1051 = vmul.f32 %v1046, %v1050
  %v1052 = vld [vmem:[%s6] sm:$0xf]
  %v1053 = vpack.c.bf16 %v1052, %v1052
  %v1054 = vpack.c.bf16 %v1051, %v1051
  %v1056 = vsel %vm192, %v1053, 0
  %v1059 = vsel %vm196, %v1054, 0
  %1061 = vmatprep.subr.bf16.mxu0 0
  %1062 = vmatpush1.bf16.msra.mxu0 0
  %1063 = vmatprep.subr.bf16.mxu0 0
  %1064 = vmatpush1.bf16.msra.mxu0 0
  %1065 = vmatprep.subr.bf16.mxu0 0
  %1066 = vmatpush1.bf16.msra.mxu0 0
  %1067 = vmatprep.subr.bf16.mxu0 0
  %1068 = vmatpush1.bf16.msra.mxu0 0
  %1069 = vmatprep.subr.bf16.mxu0 0
  %1070 = vmatpush1.bf16.msra.mxu0 0
  %1071 = vmatprep.subr.bf16.mxu0 0
  %1072 = vmatpush1.bf16.msra.mxu0 0
  %1073 = vmatprep.subr.bf16.mxu0 0
  %1074 = vmatpush1.bf16.msra.mxu0 0
  %1075 = vmatprep.subr.bf16.mxu0 0
  %1076 = vmatpush1.bf16.msra.mxu0 %v1059
  %1077 = vmatprep.subr.bf16.mxu0 0
  %1078 = vmatpush2.bf16.msra.mxu0 0
  %1079 = vmatprep.subr.bf16.mxu0 0
  %1080 = vmatpush2.bf16.msra.mxu0 0
  %1081 = vmatprep.subr.bf16.mxu0 0
  %1082 = vmatpush2.bf16.msra.mxu0 0
  %1083 = vmatprep.subr.bf16.mxu0 0
  %1084 = vmatpush2.bf16.msra.mxu0 0
  %1085 = vmatprep.subr.bf16.mxu0 0
  %1086 = vmatpush2.bf16.msra.mxu0 0
  %1087 = vmatprep.subr.bf16.mxu0 0
  %1088 = vmatpush2.bf16.msra.mxu0 0
  %1089 = vmatprep.subr.bf16.mxu0 0
  %1090 = vmatpush2.bf16.msra.mxu0 0
  %1091 = vmatprep.subr.bf16.mxu0 0
  %1092 = vmatpush2.bf16.msra.mxu0 0
  %1093 = vmatprep.mubr.bf16.mxu0 0
  %1094 = vmatmul.mubr.bf16.gmra.mxu0 %v1056
  %v1095 = vpop.f32.mrf.mxu0
  %v1096 = vadd.f32 0.0, %v1095
  %v1097 = vpop.f32.mrf.mxu0
  %v1098 = vpop.f32.mrf.mxu0
  %v1099 = vpop.f32.mrf.mxu0
  %1100 = vdwg.mxu0
  %v1101 = vpack.c.bf16 %v1096, %v1096
  %v1103 = vsel %vm241, %v1101, 0
  %1105 = vmatprep.subr.bf16.mxu0 0
  %1106 = vmatpush1.bf16.msra.mxu0 0
  %1107 = vmatprep.subr.bf16.mxu0 0
  %1108 = vmatpush1.bf16.msra.mxu0 0
  %1109 = vmatprep.subr.bf16.mxu0 0
  %1110 = vmatpush1.bf16.msra.mxu0 0
  %1111 = vmatprep.subr.bf16.mxu0 0
  %1112 = vmatpush1.bf16.msra.mxu0 0
  %1113 = vmatprep.subr.bf16.mxu0 0
  %1114 = vmatpush1.bf16.msra.mxu0 0
  %1115 = vmatprep.subr.bf16.mxu0 0
  %1116 = vmatpush1.bf16.msra.mxu0 0
  %1117 = vmatprep.subr.bf16.mxu0 0
  %1118 = vmatpush1.bf16.msra.mxu0 %v944
  %1119 = vmatprep.subr.bf16.mxu0 0
  %1120 = vmatpush1.bf16.msra.mxu0 %v943
  %1121 = vmatprep.subr.bf16.mxu0 0
  %1122 = vmatpush2.bf16.msra.mxu0 0
  %1123 = vmatprep.subr.bf16.mxu0 0
  %1124 = vmatpush2.bf16.msra.mxu0 0
  %1125 = vmatprep.subr.bf16.mxu0 0
  %1126 = vmatpush2.bf16.msra.mxu0 0
  %1127 = vmatprep.subr.bf16.mxu0 0
  %1128 = vmatpush2.bf16.msra.mxu0 0
  %1129 = vmatprep.subr.bf16.mxu0 0
  %1130 = vmatpush2.bf16.msra.mxu0 0
  %1131 = vmatprep.subr.bf16.mxu0 0
  %1132 = vmatpush2.bf16.msra.mxu0 0
  %1133 = vmatprep.subr.bf16.mxu0 0
  %1134 = vmatpush2.bf16.msra.mxu0 0
  %1135 = vmatprep.subr.bf16.mxu0 0
  %1136 = vmatpush2.bf16.msra.mxu0 0
  %1137 = vmatprep.mubr.bf16.mxu0 0
  %1138 = vmatmul.mubr.bf16.gmra.mxu0 %v1103
  %v1139 = vpop.f32.mrf.mxu0
  %v1140 = vadd.f32 0.0, %v1139
  %v1141 = vpop.f32.mrf.mxu0
  %v1142 = vpop.f32.mrf.mxu0
  %v1143 = vpop.f32.mrf.mxu0
  %1144 = vdwg.mxu0
  %s1145 = scalar_lea.vmem %s10, 4
  %1146 = vst.msk [vmem:[%s1145] sm:$0xf] %vm83, %v1140
  %s1147 = scalar_lea.vmem %s1, 8
  %v1148 = vld [vmem:[%s1147] sm:$0xff]
  %v1149 = vmul.f32 %v1148, %v1148
  %v1150 = vsel %vm48, %v1149, 0.0
  %1151 = vadd.xlane.f32.xlu0 %v1150
  %v1152 = vpop.xlane.xlu0 %1151
  %v1153 = vmax.f32 %v1152, 1e-24
  %v1154 = vrsqrt.pop %v1153
  %v1155 = vmul.f32 %v1148, %v1154
  %v1156 = vpack.c.bf16 %v1155, %v1155
  %v1158 = vsel %vm48, %v1156, 0
  %1160 = vmatprep.subr.bf16.mxu0 0
  %1161 = vmatpush1.bf16.xpose.msra.mxu0 0
  %1162 = vmatprep.subr.bf16.mxu0 0
  %1163 = vmatpush1.bf16.xpose.msra.mxu0 0
  %1164 = vmatprep.subr.bf16.mxu0 0
  %1165 = vmatpush1.bf16.xpose.msra.mxu0 0
  %1166 = vmatprep.subr.bf16.mxu0 0
  %1167 = vmatpush1.bf16.xpose.msra.mxu0 0
  %1168 = vmatprep.subr.bf16.mxu0 0
  %1169 = vmatpush1.bf16.xpose.msra.mxu0 0
  %1170 = vmatprep.subr.bf16.mxu0 0
  %1171 = vmatpush1.bf16.xpose.msra.mxu0 0
  %1172 = vmatprep.subr.bf16.mxu0 0
  %1173 = vmatpush1.bf16.xpose.msra.mxu0 %v962
  %1174 = vmatprep.subr.bf16.mxu0 0
  %1175 = vmatpush1.bf16.xpose.msra.mxu0 %v959
  %1176 = vmatprep.subr.bf16.mxu0 0
  %1177 = vmatpush2.bf16.xpose.msra.mxu0 0
  %1178 = vmatprep.subr.bf16.mxu0 0
  %1179 = vmatpush2.bf16.xpose.msra.mxu0 0
  %1180 = vmatprep.subr.bf16.mxu0 0
  %1181 = vmatpush2.bf16.xpose.msra.mxu0 0
  %1182 = vmatprep.subr.bf16.mxu0 0
  %1183 = vmatpush2.bf16.xpose.msra.mxu0 0
  %1184 = vmatprep.subr.bf16.mxu0 0
  %1185 = vmatpush2.bf16.xpose.msra.mxu0 0
  %1186 = vmatprep.subr.bf16.mxu0 0
  %1187 = vmatpush2.bf16.xpose.msra.mxu0 0
  %1188 = vmatprep.subr.bf16.mxu0 0
  %1189 = vmatpush2.bf16.xpose.msra.mxu0 0
  %1190 = vmatprep.subr.bf16.mxu0 0
  %1191 = vmatpush2.bf16.xpose.msra.mxu0 0
  %1192 = vmatprep.mubr.bf16.mxu0 0
  %1193 = vmatmul.mubr.bf16.gmra.mxu0 %v1158
  %v1194 = vpop.f32.mrf.mxu0
  %v1195 = vadd.f32 0.0, %v1194
  %v1196 = vpop.f32.mrf.mxu0
  %v1197 = vpop.f32.mrf.mxu0
  %v1198 = vpop.f32.mrf.mxu0
  %1199 = vdwg.mxu0
  %v1200 = vsel %vm241, %v1195, 0.0
  %1201 = vadd.xlane.f32.xlu0 %v1200
  %v1202 = vpop.xlane.xlu0 %1201
  %v1203 = vrot.slane %v1202, 4
  %v1204 = vadd.f32 %v1202, %v1203
  %v1205 = vrot.slane %v1204, 2
  %v1206 = vadd.f32 %v1204, %v1205
  %v1207 = vrot.slane %v1206, 1
  %v1208 = vadd.f32 %v1206, %v1207
  %s1209 = vtos %v1208
  %s1210 = smul.f32 %s1209, 0.00390625
  %v1211 = vmul.f32 %v1195, %v1195
  %v1212 = vsel %vm241, %v1211, 0.0
  %1213 = vadd.xlane.f32.xlu0 %v1212
  %v1214 = vpop.xlane.xlu0 %1213
  %v1215 = vrot.slane %v1214, 4
  %v1216 = vadd.f32 %v1214, %v1215
  %v1217 = vrot.slane %v1216, 2
  %v1218 = vadd.f32 %v1216, %v1217
  %v1219 = vrot.slane %v1218, 1
  %v1220 = vadd.f32 %v1218, %v1219
  %s1221 = vtos %v1220
  %s1222 = smul.f32 %s1221, 0.00390625
  %s1223 = smul.f32 %s1210, 0.17677669
  %s1224 = smul.f32 %s1222, 0.03125
  %s1225 = smul.f32 %s1223, %s1223
  %s1226 = ssub.f32 %s1224, %s1225
  %s1227 = sadd.f32 %s1226, 1e-05
  %v1228 = vstv %s1227
  %v1229 = vrsqrt.pop %v1228
  %s1230 = vtos %v1229
  %s1231 = smul.f32 %s1230, 0.17677669
  %v1232 = vstv %s1231
  %v1233 = vmul.f32 %v1195, %v1232
  %s1234 = smul.f32 %s1223, %s1230
  %v1235 = vstv %s1234
  %v1236 = vsub.f32 %v1233, %v1235
  %v1237 = vsel %vm241, %v1236, -inf
  %1238 = vmax.xlane.f32.xlu0 %v1237
  %v1239 = vpop.xlane.xlu0 %1238
  %v1240 = vsub.f32 %v1236, %v1239
  %v1241 = vmul.f32 %v1240, 1.442695
  %v1242 = vpow.pop %v1241
  %v1243 = vsel %vm241, %v1242, 0.0
  %1244 = vadd.xlane.f32.xlu0 %v1243
  %v1245 = vpop.xlane.xlu0 %1244
  %v1246 = vrcp.pop %v1245
  %v1247 = vmul.f32 %v1242, %v1246
  %v1248 = vld [vmem:[%s7] sm:$0xff]
  %v1249 = vpack.c.bf16 %v1248, %v1248
  %v1250 = vpack.c.bf16 %v1247, %v1247
  %v1252 = vsel %vm389, %v1249, 0
  %v1255 = vsel %vm393, %v1250, 0
  %1257 = vmatprep.subr.bf16.mxu0 0
  %1258 = vmatpush1.bf16.msra.mxu0 0
  %1259 = vmatprep.subr.bf16.mxu0 0
  %1260 = vmatpush1.bf16.msra.mxu0 0
  %1261 = vmatprep.subr.bf16.mxu0 0
  %1262 = vmatpush1.bf16.msra.mxu0 0
  %1263 = vmatprep.subr.bf16.mxu0 0
  %1264 = vmatpush1.bf16.msra.mxu0 0
  %1265 = vmatprep.subr.bf16.mxu0 0
  %1266 = vmatpush1.bf16.msra.mxu0 0
  %1267 = vmatprep.subr.bf16.mxu0 0
  %1268 = vmatpush1.bf16.msra.mxu0 0
  %1269 = vmatprep.subr.bf16.mxu0 0
  %1270 = vmatpush1.bf16.msra.mxu0 0
  %1271 = vmatprep.subr.bf16.mxu0 0
  %1272 = vmatpush1.bf16.msra.mxu0 %v1255
  %1273 = vmatprep.subr.bf16.mxu0 0
  %1274 = vmatpush2.bf16.msra.mxu0 0
  %1275 = vmatprep.subr.bf16.mxu0 0
  %1276 = vmatpush2.bf16.msra.mxu0 0
  %1277 = vmatprep.subr.bf16.mxu0 0
  %1278 = vmatpush2.bf16.msra.mxu0 0
  %1279 = vmatprep.subr.bf16.mxu0 0
  %1280 = vmatpush2.bf16.msra.mxu0 0
  %1281 = vmatprep.subr.bf16.mxu0 0
  %1282 = vmatpush2.bf16.msra.mxu0 0
  %1283 = vmatprep.subr.bf16.mxu0 0
  %1284 = vmatpush2.bf16.msra.mxu0 0
  %1285 = vmatprep.subr.bf16.mxu0 0
  %1286 = vmatpush2.bf16.msra.mxu0 0
  %1287 = vmatprep.subr.bf16.mxu0 0
  %1288 = vmatpush2.bf16.msra.mxu0 0
  %1289 = vmatprep.mubr.bf16.mxu0 0
  %1290 = vmatmul.mubr.bf16.gmra.mxu0 %v1252
  %v1291 = vpop.f32.mrf.mxu0
  %v1292 = vadd.f32 0.0, %v1291
  %v1293 = vpop.f32.mrf.mxu0
  %v1294 = vpop.f32.mrf.mxu0
  %v1295 = vpop.f32.mrf.mxu0
  %1296 = vdwg.mxu0
  %v1297 = vpack.c.bf16 %v1292, %v1292
  %v1299 = vsel %vm241, %v1297, 0
  %1301 = vmatprep.subr.bf16.mxu0 0
  %1302 = vmatpush1.bf16.msra.mxu0 0
  %1303 = vmatprep.subr.bf16.mxu0 0
  %1304 = vmatpush1.bf16.msra.mxu0 0
  %1305 = vmatprep.subr.bf16.mxu0 0
  %1306 = vmatpush1.bf16.msra.mxu0 0
  %1307 = vmatprep.subr.bf16.mxu0 0
  %1308 = vmatpush1.bf16.msra.mxu0 0
  %1309 = vmatprep.subr.bf16.mxu0 0
  %1310 = vmatpush1.bf16.msra.mxu0 0
  %1311 = vmatprep.subr.bf16.mxu0 0
  %1312 = vmatpush1.bf16.msra.mxu0 0
  %1313 = vmatprep.subr.bf16.mxu0 0
  %1314 = vmatpush1.bf16.msra.mxu0 %v944
  %1315 = vmatprep.subr.bf16.mxu0 0
  %1316 = vmatpush1.bf16.msra.mxu0 %v943
  %1317 = vmatprep.subr.bf16.mxu0 0
  %1318 = vmatpush2.bf16.msra.mxu0 0
  %1319 = vmatprep.subr.bf16.mxu0 0
  %1320 = vmatpush2.bf16.msra.mxu0 0
  %1321 = vmatprep.subr.bf16.mxu0 0
  %1322 = vmatpush2.bf16.msra.mxu0 0
  %1323 = vmatprep.subr.bf16.mxu0 0
  %1324 = vmatpush2.bf16.msra.mxu0 0
  %1325 = vmatprep.subr.bf16.mxu0 0
  %1326 = vmatpush2.bf16.msra.mxu0 0
  %1327 = vmatprep.subr.bf16.mxu0 0
  %1328 = vmatpush2.bf16.msra.mxu0 0
  %1329 = vmatprep.subr.bf16.mxu0 0
  %1330 = vmatpush2.bf16.msra.mxu0 0
  %1331 = vmatprep.subr.bf16.mxu0 0
  %1332 = vmatpush2.bf16.msra.mxu0 0
  %1333 = vmatprep.mubr.bf16.mxu0 0
  %1334 = vmatmul.mubr.bf16.gmra.mxu0 %v1299
  %v1335 = vpop.f32.mrf.mxu0
  %v1336 = vadd.f32 0.0, %v1335
  %v1337 = vpop.f32.mrf.mxu0
  %v1338 = vpop.f32.mrf.mxu0
  %v1339 = vpop.f32.mrf.mxu0
  %1340 = vdwg.mxu0
  %s1341 = scalar_lea.vmem %s11, 8
  %1342 = vst.msk [vmem:[%s1341] sm:$0xff] %vm48, %v1336
  %s1343 = scalar_lea.vmem %s2, 8
  %v1344 = vld [vmem:[%s1343] sm:$0xff]
  %v1345 = vmul.f32 %v1344, %v1344
  %v1346 = vsel %vm48, %v1345, 0.0
  %1347 = vadd.xlane.f32.xlu0 %v1346
  %v1348 = vpop.xlane.xlu0 %1347
  %v1349 = vmax.f32 %v1348, 1e-24
  %v1350 = vrsqrt.pop %v1349
  %v1351 = vmul.f32 %v1344, %v1350
  %v1352 = vpack.c.bf16 %v1351, %v1351
  %v1354 = vsel %vm48, %v1352, 0
  %1356 = vmatprep.subr.bf16.mxu0 0
  %1357 = vmatpush1.bf16.xpose.msra.mxu0 0
  %1358 = vmatprep.subr.bf16.mxu0 0
  %1359 = vmatpush1.bf16.xpose.msra.mxu0 0
  %1360 = vmatprep.subr.bf16.mxu0 0
  %1361 = vmatpush1.bf16.xpose.msra.mxu0 0
  %1362 = vmatprep.subr.bf16.mxu0 0
  %1363 = vmatpush1.bf16.xpose.msra.mxu0 0
  %1364 = vmatprep.subr.bf16.mxu0 0
  %1365 = vmatpush1.bf16.xpose.msra.mxu0 0
  %1366 = vmatprep.subr.bf16.mxu0 0
  %1367 = vmatpush1.bf16.xpose.msra.mxu0 0
  %1368 = vmatprep.subr.bf16.mxu0 0
  %1369 = vmatpush1.bf16.xpose.msra.mxu0 %v962
  %1370 = vmatprep.subr.bf16.mxu0 0
  %1371 = vmatpush1.bf16.xpose.msra.mxu0 %v959
  %1372 = vmatprep.subr.bf16.mxu0 0
  %1373 = vmatpush2.bf16.xpose.msra.mxu0 0
  %1374 = vmatprep.subr.bf16.mxu0 0
  %1375 = vmatpush2.bf16.xpose.msra.mxu0 0
  %1376 = vmatprep.subr.bf16.mxu0 0
  %1377 = vmatpush2.bf16.xpose.msra.mxu0 0
  %1378 = vmatprep.subr.bf16.mxu0 0
  %1379 = vmatpush2.bf16.xpose.msra.mxu0 0
  %1380 = vmatprep.subr.bf16.mxu0 0
  %1381 = vmatpush2.bf16.xpose.msra.mxu0 0
  %1382 = vmatprep.subr.bf16.mxu0 0
  %1383 = vmatpush2.bf16.xpose.msra.mxu0 0
  %1384 = vmatprep.subr.bf16.mxu0 0
  %1385 = vmatpush2.bf16.xpose.msra.mxu0 0
  %1386 = vmatprep.subr.bf16.mxu0 0
  %1387 = vmatpush2.bf16.xpose.msra.mxu0 0
  %1388 = vmatprep.mubr.bf16.mxu0 0
  %1389 = vmatmul.mubr.bf16.gmra.mxu0 %v1354
  %v1390 = vpop.f32.mrf.mxu0
  %v1391 = vadd.f32 0.0, %v1390
  %v1392 = vpop.f32.mrf.mxu0
  %v1393 = vpop.f32.mrf.mxu0
  %v1394 = vpop.f32.mrf.mxu0
  %1395 = vdwg.mxu0
  %v1396 = vsel %vm241, %v1391, 0.0
  %1397 = vadd.xlane.f32.xlu0 %v1396
  %v1398 = vpop.xlane.xlu0 %1397
  %v1399 = vrot.slane %v1398, 4
  %v1400 = vadd.f32 %v1398, %v1399
  %v1401 = vrot.slane %v1400, 2
  %v1402 = vadd.f32 %v1400, %v1401
  %v1403 = vrot.slane %v1402, 1
  %v1404 = vadd.f32 %v1402, %v1403
  %s1405 = vtos %v1404
  %s1406 = smul.f32 %s1405, 0.00390625
  %v1407 = vmul.f32 %v1391, %v1391
  %v1408 = vsel %vm241, %v1407, 0.0
  %1409 = vadd.xlane.f32.xlu0 %v1408
  %v1410 = vpop.xlane.xlu0 %1409
  %v1411 = vrot.slane %v1410, 4
  %v1412 = vadd.f32 %v1410, %v1411
  %v1413 = vrot.slane %v1412, 2
  %v1414 = vadd.f32 %v1412, %v1413
  %v1415 = vrot.slane %v1414, 1
  %v1416 = vadd.f32 %v1414, %v1415
  %s1417 = vtos %v1416
  %s1418 = smul.f32 %s1417, 0.00390625
  %s1419 = smul.f32 %s1406, 0.17677669
  %s1420 = smul.f32 %s1418, 0.03125
  %s1421 = smul.f32 %s1419, %s1419
  %s1422 = ssub.f32 %s1420, %s1421
  %s1423 = sadd.f32 %s1422, 1e-05
  %v1424 = vstv %s1423
  %v1425 = vrsqrt.pop %v1424
  %s1426 = vtos %v1425
  %s1427 = smul.f32 %s1426, 0.17677669
  %v1428 = vstv %s1427
  %v1429 = vmul.f32 %v1391, %v1428
  %s1430 = smul.f32 %s1419, %s1426
  %v1431 = vstv %s1430
  %v1432 = vsub.f32 %v1429, %v1431
  %v1433 = vsel %vm241, %v1432, -inf
  %1434 = vmax.xlane.f32.xlu0 %v1433
  %v1435 = vpop.xlane.xlu0 %1434
  %v1436 = vsub.f32 %v1432, %v1435
  %v1437 = vmul.f32 %v1436, 1.442695
  %v1438 = vpow.pop %v1437
  %v1439 = vsel %vm241, %v1438, 0.0
  %1440 = vadd.xlane.f32.xlu0 %v1439
  %v1441 = vpop.xlane.xlu0 %1440
  %v1442 = vrcp.pop %v1441
  %v1443 = vmul.f32 %v1438, %v1442
  %v1444 = vld [vmem:[%s8] sm:$0xff]
  %v1445 = vpack.c.bf16 %v1444, %v1444
  %v1446 = vpack.c.bf16 %v1443, %v1443
  %v1448 = vsel %vm389, %v1445, 0
  %v1451 = vsel %vm393, %v1446, 0
  %1453 = vmatprep.subr.bf16.mxu0 0
  %1454 = vmatpush1.bf16.msra.mxu0 0
  %1455 = vmatprep.subr.bf16.mxu0 0
  %1456 = vmatpush1.bf16.msra.mxu0 0
  %1457 = vmatprep.subr.bf16.mxu0 0
  %1458 = vmatpush1.bf16.msra.mxu0 0
  %1459 = vmatprep.subr.bf16.mxu0 0
  %1460 = vmatpush1.bf16.msra.mxu0 0
  %1461 = vmatprep.subr.bf16.mxu0 0
  %1462 = vmatpush1.bf16.msra.mxu0 0
  %1463 = vmatprep.subr.bf16.mxu0 0
  %1464 = vmatpush1.bf16.msra.mxu0 0
  %1465 = vmatprep.subr.bf16.mxu0 0
  %1466 = vmatpush1.bf16.msra.mxu0 0
  %1467 = vmatprep.subr.bf16.mxu0 0
  %1468 = vmatpush1.bf16.msra.mxu0 %v1451
  %1469 = vmatprep.subr.bf16.mxu0 0
  %1470 = vmatpush2.bf16.msra.mxu0 0
  %1471 = vmatprep.subr.bf16.mxu0 0
  %1472 = vmatpush2.bf16.msra.mxu0 0
  %1473 = vmatprep.subr.bf16.mxu0 0
  %1474 = vmatpush2.bf16.msra.mxu0 0
  %1475 = vmatprep.subr.bf16.mxu0 0
  %1476 = vmatpush2.bf16.msra.mxu0 0
  %1477 = vmatprep.subr.bf16.mxu0 0
  %1478 = vmatpush2.bf16.msra.mxu0 0
  %1479 = vmatprep.subr.bf16.mxu0 0
  %1480 = vmatpush2.bf16.msra.mxu0 0
  %1481 = vmatprep.subr.bf16.mxu0 0
  %1482 = vmatpush2.bf16.msra.mxu0 0
  %1483 = vmatprep.subr.bf16.mxu0 0
  %1484 = vmatpush2.bf16.msra.mxu0 0
  %1485 = vmatprep.mubr.bf16.mxu0 0
  %1486 = vmatmul.mubr.bf16.gmra.mxu0 %v1448
  %v1487 = vpop.f32.mrf.mxu0
  %v1488 = vadd.f32 0.0, %v1487
  %v1489 = vpop.f32.mrf.mxu0
  %v1490 = vpop.f32.mrf.mxu0
  %v1491 = vpop.f32.mrf.mxu0
  %1492 = vdwg.mxu0
  %v1493 = vpack.c.bf16 %v1488, %v1488
  %v1495 = vsel %vm241, %v1493, 0
  %1497 = vmatprep.subr.bf16.mxu0 0
  %1498 = vmatpush1.bf16.msra.mxu0 0
  %1499 = vmatprep.subr.bf16.mxu0 0
  %1500 = vmatpush1.bf16.msra.mxu0 0
  %1501 = vmatprep.subr.bf16.mxu0 0
  %1502 = vmatpush1.bf16.msra.mxu0 0
  %1503 = vmatprep.subr.bf16.mxu0 0
  %1504 = vmatpush1.bf16.msra.mxu0 0
  %1505 = vmatprep.subr.bf16.mxu0 0
  %1506 = vmatpush1.bf16.msra.mxu0 0
  %1507 = vmatprep.subr.bf16.mxu0 0
  %1508 = vmatpush1.bf16.msra.mxu0 0
  %1509 = vmatprep.subr.bf16.mxu0 0
  %1510 = vmatpush1.bf16.msra.mxu0 %v944
  %1511 = vmatprep.subr.bf16.mxu0 0
  %1512 = vmatpush1.bf16.msra.mxu0 %v943
  %1513 = vmatprep.subr.bf16.mxu0 0
  %1514 = vmatpush2.bf16.msra.mxu0 0
  %1515 = vmatprep.subr.bf16.mxu0 0
  %1516 = vmatpush2.bf16.msra.mxu0 0
  %1517 = vmatprep.subr.bf16.mxu0 0
  %1518 = vmatpush2.bf16.msra.mxu0 0
  %1519 = vmatprep.subr.bf16.mxu0 0
  %1520 = vmatpush2.bf16.msra.mxu0 0
  %1521 = vmatprep.subr.bf16.mxu0 0
  %1522 = vmatpush2.bf16.msra.mxu0 0
  %1523 = vmatprep.subr.bf16.mxu0 0
  %1524 = vmatpush2.bf16.msra.mxu0 0
  %1525 = vmatprep.subr.bf16.mxu0 0
  %1526 = vmatpush2.bf16.msra.mxu0 0
  %1527 = vmatprep.subr.bf16.mxu0 0
  %1528 = vmatpush2.bf16.msra.mxu0 0
  %1529 = vmatprep.mubr.bf16.mxu0 0
  %1530 = vmatmul.mubr.bf16.gmra.mxu0 %v1495
  %v1531 = vpop.f32.mrf.mxu0
  %v1532 = vadd.f32 0.0, %v1531
  %v1533 = vpop.f32.mrf.mxu0
  %v1534 = vpop.f32.mrf.mxu0
  %v1535 = vpop.f32.mrf.mxu0
  %1536 = vdwg.mxu0
  %s1537 = scalar_lea.vmem %s12, 8
  %1538 = vst.msk [vmem:[%s1537] sm:$0xff] %vm48, %v1532
  %s1539 = scalar_lea.vmem %s3, 16
  %v1540 = vld [vmem:[%s1539] sm:$0xff]
  %v1541 = vld [vmem:[%s1539 + $0x8] sm:$0xf]
  %v1542 = vmul.f32 %v1540, %v1540
  %v1543 = vmul.f32 %v1541, %v1541
  %v1544 = vsel %vm48, %v1542, 0.0
  %1545 = vadd.xlane.f32.xlu0 %v1544
  %v1546 = vpop.xlane.xlu0 %1545
  %v1547 = vsel %vm83, %v1543, 0.0
  %1548 = vadd.xlane.f32.xlu0 %v1547
  %v1549 = vpop.xlane.xlu0 %1548
  %v1550 = vmax.f32 %v1546, 1e-24
  %v1551 = vmax.f32 %v1549, 1e-24
  %v1552 = vrsqrt.pop %v1550
  %v1553 = vrsqrt.pop %v1551
  %v1554 = vmul.f32 %v1540, %v1552
  %v1555 = vmul.f32 %v1541, %v1553
  %v1556 = vpack.c.bf16 %v1555, %v1554
  %v1558 = vsel %vm48, %v1556, 0
  %1560 = vmatprep.subr.bf16.mxu0 0
  %1561 = vmatpush1.bf16.xpose.msra.mxu0 0
  %1562 = vmatprep.subr.bf16.mxu0 0
  %1563 = vmatpush1.bf16.xpose.msra.mxu0 0
  %1564 = vmatprep.subr.bf16.mxu0 0
  %1565 = vmatpush1.bf16.xpose.msra.mxu0 0
  %1566 = vmatprep.subr.bf16.mxu0 0
  %1567 = vmatpush1.bf16.xpose.msra.mxu0 0
  %1568 = vmatprep.subr.bf16.mxu0 0
  %1569 = vmatpush1.bf16.xpose.msra.mxu0 0
  %1570 = vmatprep.subr.bf16.mxu0 0
  %1571 = vmatpush1.bf16.xpose.msra.mxu0 0
  %1572 = vmatprep.subr.bf16.mxu0 0
  %1573 = vmatpush1.bf16.xpose.msra.mxu0 %v962
  %1574 = vmatprep.subr.bf16.mxu0 0
  %1575 = vmatpush1.bf16.xpose.msra.mxu0 %v959
  %1576 = vmatprep.subr.bf16.mxu0 0
  %1577 = vmatpush2.bf16.xpose.msra.mxu0 0
  %1578 = vmatprep.subr.bf16.mxu0 0
  %1579 = vmatpush2.bf16.xpose.msra.mxu0 0
  %1580 = vmatprep.subr.bf16.mxu0 0
  %1581 = vmatpush2.bf16.xpose.msra.mxu0 0
  %1582 = vmatprep.subr.bf16.mxu0 0
  %1583 = vmatpush2.bf16.xpose.msra.mxu0 0
  %1584 = vmatprep.subr.bf16.mxu0 0
  %1585 = vmatpush2.bf16.xpose.msra.mxu0 0
  %1586 = vmatprep.subr.bf16.mxu0 0
  %1587 = vmatpush2.bf16.xpose.msra.mxu0 0
  %1588 = vmatprep.subr.bf16.mxu0 0
  %1589 = vmatpush2.bf16.xpose.msra.mxu0 0
  %1590 = vmatprep.subr.bf16.mxu0 0
  %1591 = vmatpush2.bf16.xpose.msra.mxu0 0
  %1592 = vmatprep.mubr.bf16.mxu0 0
  %1593 = vmatmul.mubr.bf16.gmra.mxu0 %v1558
  %v1594 = vpop.f32.mrf.mxu0
  %v1595 = vadd.f32 0.0, %v1594
  %v1596 = vpop.f32.mrf.mxu0
  %v1597 = vpop.f32.mrf.mxu0
  %v1598 = vadd.f32 0.0, %v1597
  %v1599 = vpop.f32.mrf.mxu0
  %1600 = vdwg.mxu0
  %v1601 = vsel %vm241, %v1595, 0.0
  %v1602 = vsel %vm140, %v1598, 0.0
  %v1603 = vadd.f32 %v1601, %v1602
  %1604 = vadd.xlane.f32.xlu0 %v1603
  %v1605 = vpop.xlane.xlu0 %1604
  %v1606 = vrot.slane %v1605, 4
  %v1607 = vadd.f32 %v1605, %v1606
  %v1608 = vrot.slane %v1607, 2
  %v1609 = vadd.f32 %v1607, %v1608
  %v1610 = vrot.slane %v1609, 1
  %v1611 = vadd.f32 %v1609, %v1610
  %s1612 = vtos %v1611
  %s1613 = smul.f32 %s1612, 0.0026041667
  %v1614 = vmul.f32 %v1595, %v1595
  %v1615 = vmul.f32 %v1598, %v1598
  %v1616 = vsel %vm241, %v1614, 0.0
  %v1617 = vsel %vm140, %v1615, 0.0
  %v1618 = vadd.f32 %v1616, %v1617
  %1619 = vadd.xlane.f32.xlu0 %v1618
  %v1620 = vpop.xlane.xlu0 %1619
  %v1621 = vrot.slane %v1620, 4
  %v1622 = vadd.f32 %v1620, %v1621
  %v1623 = vrot.slane %v1622, 2
  %v1624 = vadd.f32 %v1622, %v1623
  %v1625 = vrot.slane %v1624, 1
  %v1626 = vadd.f32 %v1624, %v1625
  %s1627 = vtos %v1626
  %s1628 = smul.f32 %s1627, 0.0026041667
  %s1629 = smul.f32 %s1613, 0.17677669
  %s1630 = smul.f32 %s1628, 0.03125
  %s1631 = smul.f32 %s1629, %s1629
  %s1632 = ssub.f32 %s1630, %s1631
  %s1633 = sadd.f32 %s1632, 1e-05
  %v1634 = vstv %s1633
  %v1635 = vrsqrt.pop %v1634
  %s1636 = vtos %v1635
  %s1637 = smul.f32 %s1636, 0.17677669
  %v1638 = vstv %s1637
  %v1639 = vmul.f32 %v1595, %v1638
  %v1640 = vmul.f32 %v1598, %v1638
  %s1641 = smul.f32 %s1629, %s1636
  %v1642 = vstv %s1641
  %v1643 = vsub.f32 %v1639, %v1642
  %v1644 = vsub.f32 %v1640, %v1642
  %v1645 = vsel %vm241, %v1643, -inf
  %1646 = vmax.xlane.f32.xlu0 %v1645
  %v1647 = vpop.xlane.xlu0 %1646
  %v1648 = vsel %vm140, %v1644, -inf
  %1649 = vmax.xlane.f32.xlu0 %v1648
  %v1650 = vpop.xlane.xlu0 %1649
  %v1651 = vsub.f32 %v1643, %v1647
  %v1652 = vsub.f32 %v1644, %v1650
  %v1653 = vmul.f32 %v1651, 1.442695
  %v1654 = vpow.pop %v1653
  %v1655 = vmul.f32 %v1652, 1.442695
  %v1656 = vpow.pop %v1655
  %v1657 = vsel %vm241, %v1654, 0.0
  %1658 = vadd.xlane.f32.xlu0 %v1657
  %v1659 = vpop.xlane.xlu0 %1658
  %v1660 = vsel %vm140, %v1656, 0.0
  %1661 = vadd.xlane.f32.xlu0 %v1660
  %v1662 = vpop.xlane.xlu0 %1661
  %v1663 = vrcp.pop %v1659
  %v1664 = vrcp.pop %v1662
  %v1665 = vmul.f32 %v1654, %v1663
  %v1666 = vmul.f32 %v1656, %v1664
  %v1667 = vld [vmem:[%s9] sm:$0xff]
  %v1668 = vld [vmem:[%s9 + $0x8] sm:$0xf]
  %v1669 = vpack.c.bf16 %v1668, %v1667
  %v1670 = vpack.c.bf16 %v1666, %v1665
  %v1672 = vsel %vm807, %v1669, 0
  %v1675 = vsel %vm811, %v1670, 0
  %1677 = vmatprep.subr.bf16.mxu0 0
  %1678 = vmatpush1.bf16.msra.mxu0 0
  %1679 = vmatprep.subr.bf16.mxu0 0
  %1680 = vmatpush1.bf16.msra.mxu0 0
  %1681 = vmatprep.subr.bf16.mxu0 0
  %1682 = vmatpush1.bf16.msra.mxu0 0
  %1683 = vmatprep.subr.bf16.mxu0 0
  %1684 = vmatpush1.bf16.msra.mxu0 0
  %1685 = vmatprep.subr.bf16.mxu0 0
  %1686 = vmatpush1.bf16.msra.mxu0 0
  %1687 = vmatprep.subr.bf16.mxu0 0
  %1688 = vmatpush1.bf16.msra.mxu0 0
  %1689 = vmatprep.subr.bf16.mxu0 0
  %1690 = vmatpush1.bf16.msra.mxu0 0
  %1691 = vmatprep.subr.bf16.mxu0 0
  %1692 = vmatpush1.bf16.msra.mxu0 %v1675
  %1693 = vmatprep.subr.bf16.mxu0 0
  %1694 = vmatpush2.bf16.msra.mxu0 0
  %1695 = vmatprep.subr.bf16.mxu0 0
  %1696 = vmatpush2.bf16.msra.mxu0 0
  %1697 = vmatprep.subr.bf16.mxu0 0
  %1698 = vmatpush2.bf16.msra.mxu0 0
  %1699 = vmatprep.subr.bf16.mxu0 0
  %1700 = vmatpush2.bf16.msra.mxu0 0
  %1701 = vmatprep.subr.bf16.mxu0 0
  %1702 = vmatpush2.bf16.msra.mxu0 0
  %1703 = vmatprep.subr.bf16.mxu0 0
  %1704 = vmatpush2.bf16.msra.mxu0 0
  %1705 = vmatprep.subr.bf16.mxu0 0
  %1706 = vmatpush2.bf16.msra.mxu0 0
  %1707 = vmatprep.subr.bf16.mxu0 0
  %1708 = vmatpush2.bf16.msra.mxu0 0
  %1709 = vmatprep.mubr.bf16.mxu0 0
  %1710 = vmatmul.mubr.bf16.gmra.mxu0 %v1672
  %v1711 = vpop.f32.mrf.mxu0
  %v1712 = vadd.f32 0.0, %v1711
  %v1713 = vpop.f32.mrf.mxu0
  %v1714 = vpop.f32.mrf.mxu0
  %v1715 = vadd.f32 0.0, %v1714
  %v1716 = vpop.f32.mrf.mxu0
  %1717 = vdwg.mxu0
  %v1718 = vpack.c.bf16 %v1715, %v1712
  %v1720 = vsel %vm241, %v1718, 0
  %1722 = vmatprep.subr.bf16.mxu0 0
  %1723 = vmatpush1.bf16.msra.mxu0 0
  %1724 = vmatprep.subr.bf16.mxu0 0
  %1725 = vmatpush1.bf16.msra.mxu0 0
  %1726 = vmatprep.subr.bf16.mxu0 0
  %1727 = vmatpush1.bf16.msra.mxu0 0
  %1728 = vmatprep.subr.bf16.mxu0 0
  %1729 = vmatpush1.bf16.msra.mxu0 0
  %1730 = vmatprep.subr.bf16.mxu0 0
  %1731 = vmatpush1.bf16.msra.mxu0 0
  %1732 = vmatprep.subr.bf16.mxu0 0
  %1733 = vmatpush1.bf16.msra.mxu0 0
  %1734 = vmatprep.subr.bf16.mxu0 0
  %1735 = vmatpush1.bf16.msra.mxu0 %v944
  %1736 = vmatprep.subr.bf16.mxu0 0
  %1737 = vmatpush1.bf16.msra.mxu0 %v943
  %1738 = vmatprep.subr.bf16.mxu0 0
  %1739 = vmatpush2.bf16.msra.mxu0 0
  %1740 = vmatprep.subr.bf16.mxu0 0
  %1741 = vmatpush2.bf16.msra.mxu0 0
  %1742 = vmatprep.subr.bf16.mxu0 0
  %1743 = vmatpush2.bf16.msra.mxu0 0
  %1744 = vmatprep.subr.bf16.mxu0 0
  %1745 = vmatpush2.bf16.msra.mxu0 0
  %1746 = vmatprep.subr.bf16.mxu0 0
  %1747 = vmatpush2.bf16.msra.mxu0 0
  %1748 = vmatprep.subr.bf16.mxu0 0
  %1749 = vmatpush2.bf16.msra.mxu0 0
  %1750 = vmatprep.subr.bf16.mxu0 0
  %1751 = vmatpush2.bf16.msra.mxu0 0
  %1752 = vmatprep.subr.bf16.mxu0 0
  %1753 = vmatpush2.bf16.msra.mxu0 0
  %1754 = vmatprep.mubr.bf16.mxu0 0
  %1755 = vmatmul.mubr.bf16.gmra.mxu0 %v1720
  %v1756 = vpop.f32.mrf.mxu0
  %v1757 = vadd.f32 0.0, %v1756
  %v1758 = vpop.f32.mrf.mxu0
  %v1759 = vpop.f32.mrf.mxu0
  %v1760 = vadd.f32 0.0, %v1759
  %v1761 = vpop.f32.mrf.mxu0
  %1762 = vdwg.mxu0
  %s1763 = scalar_lea.vmem %s13, 16
  %1764 = vst.msk [vmem:[%s1763] sm:$0xff] %vm48, %v1757
  %1765 = vst.msk [vmem:[%s1763 + $0x8] sm:$0xf] %vm83, %v1760
  // Predicated region
  $region42: #{ssca_forward.1} parent=0 // pred_check
    _
  $region43: #{ssca_forward.1} parent=0 // pred_check_branch
    %1767 = sbr.rel (0) target = $region45
  $region44: #{ssca_forward.1} parent=0 // pred_region
    _
  $region45: #{ssca_forward.1} parent=0 // pred_fallthru
    _
  // Predicated region
  $region46: #{ssca_forward.1} parent=0 // pred_check
    _
  $region47: #{ssca_forward.1} parent=0 // pred_check_branch
    %1769 = sbr.rel (0) target = $region49
  $region48: #{ssca_forward.1} parent=0 // pred_region
    _
  $region49: #{ssca_forward.1} parent=0 // pred_fallthru
    _
  // Predicated region
  $region50: #{ssca_forward.1} parent=0 // pred_check
    _
  $region51: #{ssca_forward.1} parent=0 // pred_check_branch
    %1771 = sbr.rel (0) target = $region53
  $region52: #{ssca_forward.1} parent=0 // pred_region
    _
  $region53: #{ssca_forward.1} parent=0 // pred_fallthru
    _
  // Predicated region
  $region54: #{ssca_forward.1} parent=0 // pred_check
    _
  $region55: #{ssca_forward.1} parent=0 // pred_check_branch
    %1773 = sbr.rel (0) target = $region57
  $region56: #{ssca_forward.1} parent=0 // pred_region
    _
  $region57: #{ssca_forward.1} parent=0 // pred_fallthru
    _
  // Predicated region
  $region58: #{ssca_forward.1} parent=0 // pred_check
    _
  $region59: #{ssca_forward.1} parent=0 // pred_check_branch
    %1775 = sbr.rel (0) target = $region61
  $region60: #{ssca_forward.1} parent=0 // pred_region
    _
  $region61: #{ssca_forward.1} parent=0 // pred_fallthru
    _
  // Predicated region
  $region62: #{ssca_forward.1} parent=0 // pred_check
    _
  $region63: #{ssca_forward.1} parent=0 // pred_check_branch
    %1777 = sbr.rel (0) target = $region65
  $region64: #{ssca_forward.1} parent=0 // pred_region
    _
  $region65: #{ssca_forward.1} parent=0 // pred_fallthru
    _
  // Predicated region
  $region66: #{ssca_forward.1} parent=0 // pred_check
    _
  $region67: #{ssca_forward.1} parent=0 // pred_check_branch
    %1779 = sbr.rel (0) target = $region69
  $region68: #{ssca_forward.1} parent=0 // pred_region
    _
  $region69: #{ssca_forward.1} parent=0 // pred_fallthru
    _
  // Predicated region
  $region70: #{ssca_forward.1} parent=0 // pred_check
    _
  $region71: #{ssca_forward.1} parent=0 // pred_check_branch
    %1781 = sbr.rel (0) target = $region73
  $region72: #{ssca_forward.1} parent=0 // pred_region
    _
  $region73: #{ssca_forward.1} parent=0 // pred_fallthru
    _

</llo_original>
